<compile_context>
chip_gen: v6e
topology: v6e:2x2x1
jax: 0.10.0
libtpu: 0.0.40
codegen_flags: <defaults>
</compile_context>

<pallas_src>
import functools

import jax
import jax.numpy as jnp
from jax import lax
from jax.experimental import pallas as pl
from jax.experimental.pallas import tpu as pltpu


# ----------------------------- fused Pallas kernel -------------------------- #

def _rezero_fused_kernel(x_ref, w_ref, p_ref, o_ref, *,
                         n_batch, c_in, c_out, height, width,
                         kh, kw, dilation, padding, pad, eps):
    """Fused ReZero(Conv2dBlock) forward; everything VMEM/register-resident.

    x_ref: (C_in, PAD + N*H*W + PAD)  input, flattened (n, h, w) lane order,
                                      zero-padded so shifted views are slices
    w_ref: (2*C_out, kh*kw*C_in)      rows [0:C_out] = conv taps (i, j, ci),
                                      rows [C_out:]  = nin weights at the
                                      centre tap only (identity fusion)
    p_ref: (C_out, 3 + W)             [gamma | beta | nin_bias | alpha(w)]
    o_ref: (N, C_out, H*W)            lane-dense output
    """
    hw = height * width
    m = n_batch * hw
    f32 = jnp.float32
    inv_m = f32(1.0 / m)

    # Per-output-column (h, w) coordinates (independent of n).  H and W are
    # powers of two here so the index math is shifts/ands on the VPU.
    col = lax.broadcasted_iota(jnp.int32, (1, m), 1)
    w_shift = (width - 1).bit_length()
    w_idx = col & (width - 1)
    h_idx = (col >> w_shift) & (height - 1)

    # Conv (all taps) + the 1x1 identity projection fused into ONE accumulator.
    # Each tap view is a static slice of the padded input; zero-padding of the
    # 3x3 conv is applied with iota masks (never materialised in HBM).
    acc = jnp.zeros((2 * c_out, m), f32)
    for i in range(kh):
        dh = i * dilation - padding
        for j in range(kw):
            dw = j * dilation - padding
            t = i * kw + j
            off = dh * width + dw
            view = x_ref[:, pad + off: pad + off + m]            # (C_in, M)
            conds = []
            if dh < 0:
                conds.append(h_idx >= -dh)
            if dh > 0:
                conds.append(h_idx < height - dh)
            if dw < 0:
                conds.append(w_idx >= -dw)
            if dw > 0:
                conds.append(w_idx < width - dw)
            if conds:
                valid = functools.reduce(jnp.logical_and, conds)
                view = jnp.where(valid, view, f32(0.0))
            w_t = w_ref[:, t * c_in:(t + 1) * c_in]              # (2*C_out, C_in)
            acc = acc + jnp.dot(w_t, view, preferred_element_type=f32)

    conv = acc[:c_out, :]                      # 3x3 conv (bias cancelled by BN)
    ident = acc[c_out:, :] + p_ref[:, 2:3]     # 1x1 nin projection + its bias

    # BatchNorm (training-mode batch stats over N*H*W) + ReLU.  Two-pass
    # variance for stability (tile is tiny; single-pass only matters at scale).
    mean = jnp.sum(conv, axis=1, keepdims=True) * inv_m
    centered = conv - mean
    var = jnp.sum(centered * centered, axis=1, keepdims=True) * inv_m
    scale = p_ref[:, 0:1] * lax.rsqrt(var + f32(eps))
    branch = jnp.maximum(centered * scale + p_ref[:, 1:2], f32(0.0))

    # ReZero gate: alpha is per (channel, w).  Broadcast (C_out, W) -> (C_out, M)
    # with a tiny one-hot matmul (avoids a lane-dim reshape/tile; MXU is idle).
    onehot = (lax.broadcasted_iota(jnp.int32, (width, m), 0)
              == (lax.broadcasted_iota(jnp.int32, (width, m), 1) & (width - 1))
              ).astype(f32)
    alpha = jnp.dot(p_ref[:, 3:3 + width], onehot, preferred_element_type=f32)

    out = ident + alpha * branch               # (C_out, M)

    # Store per batch sample: result is already (N, C_out, H*W); HW is a
    # multiple of 128 so every store is an unmasked lane-dense vst.
    for n in range(n_batch):
        o_ref[n, :, :] = out[:, n * hw:(n + 1) * hw]


# ------------------------------ forward wrapper ----------------------------- #

@functools.partial(jax.jit, static_argnames=("padding", "dilation", "eps"))
def rezero_forward(x, conv_w, gamma, beta, nin_w, nin_b, alpha,
                   *, padding=1, dilation=1, eps=1e-5):
    """ReZero(Conv2dBlock) forward.

    x:      (N, C_in, H, W) f32
    conv_w: (C_out, C_in, kh, kw)  (conv bias omitted; cancelled by training BN)
    gamma, beta: (C_out,)          BatchNorm affine
    nin_w:  (C_out, C_in, 1, 1), nin_b: (C_out,)  1x1 identity projection
    alpha:  (1, C_out, 1, W)       ReZero gate (zeros on the first forward)
    """
    N, C_in, H, W = x.shape
    C_out, _, kh, kw = conv_w.shape
    H_out = H + 2 * padding - dilation * (kh - 1)
    W_out = W + 2 * padding - dilation * (kw - 1)
    assert (H_out, W_out) == (H, W), "residual add needs matching spatial dims"
    assert kh % 2 == 1 and kw % 2 == 1 and padding == dilation * (kh // 2), \
        "centre-tap fusion of the 1x1 identity requires 'same' padding"
    assert H & (H - 1) == 0 and W & (W - 1) == 0, \
        "in-kernel index math uses shifts/ands"  # TODO(synk): lax.rem path for general H/W
    HW = H * W
    M = N * HW
    K = C_in * kh * kw
    PAD = padding * (W + 1)          # max |dh*W + dw| over the kh x kw taps
    f32 = jnp.float32

    # Single lane-dense copy of the input: (C_in, N*H*W), zero-padded on both
    # ends so every in-kernel shifted view is a plain static slice.
    x_flat = jnp.transpose(x, (1, 0, 2, 3)).reshape(C_in, M).astype(f32)
    x_ext = jnp.pad(x_flat, ((0, 0), (PAD, PAD)))

    # Weight pack (2*C_out, K): top = conv taps laid out (i, j, ci) to match
    # the kernel's tap loop; bottom = nin weights, non-zero only on the centre
    # tap (whose shifted view is exactly x) -> 1x1 identity fused into the
    # same accumulator, no second matmul, no separate identity DMA.
    w_top = jnp.transpose(conv_w, (0, 2, 3, 1)).reshape(C_out, K).astype(f32)
    t_center = (kh // 2) * kw + (kw // 2)
    w_bot = jnp.zeros((C_out, K), f32).at[
        :, t_center * C_in:(t_center + 1) * C_in].set(
        nin_w.reshape(C_out, C_in).astype(f32))
    wpack = jnp.concatenate([w_top, w_bot], axis=0)

    # All tiny per-channel params in ONE (C_out, 3 + W) array -> single DMA.
    ppack = jnp.concatenate(
        [gamma.reshape(C_out, 1), beta.reshape(C_out, 1),
         nin_b.reshape(C_out, 1), alpha.reshape(C_out, W)], axis=1).astype(f32)

    kernel = functools.partial(
        _rezero_fused_kernel, n_batch=N, c_in=C_in, c_out=C_out,
        height=H, width=W, kh=kh, kw=kw, dilation=dilation, padding=padding,
        pad=PAD, eps=eps)

    # Whole problem (< 0.1 MiB) fits VMEM on v5e/v6e/v7x -> single block.
    # TODO(synk): at production sizes, tile M with a "parallel" grid axis +
    # two-pass BN so v7x's second TensorCore is used, size tiles for v7x's
    # 64 MiB VMEM (set vmem_limit_bytes), and feed bf16 inputs on v6e/v7x
    # (keep all BN / elementwise math in f32).
    y = pl.pallas_call(
        kernel,
        out_shape=jax.ShapeDtypeStruct((N, C_out, HW), f32),
        grid_spec=pl.GridSpec(
            grid=(1,),
            in_specs=[
                pl.BlockSpec((C_in, M + 2 * PAD), lambda i: (0, 0)),
                pl.BlockSpec((2 * C_out, K), lambda i: (0, 0)),
                pl.BlockSpec((C_out, 3 + W), lambda i: (0, 0)),
            ],
            out_specs=pl.BlockSpec((N, C_out, HW), lambda i: (0, 0, 0)),
        ),
        compiler_params=pltpu.CompilerParams(
            dimension_semantics=("arbitrary",)),
    )(x_ext, wpack, ppack)

    return y.reshape(N, C_out, H, W)


# ------------------------------ pure-JAX reference -------------------------- #

def _reference(x, conv_w, conv_b, gamma, beta, nin_w, nin_b, alpha,
               *, padding=1, dilation=1, eps=1e-5):
    conv = lax.conv_general_dilated(
        x, conv_w, window_strides=(1, 1),
        padding=((padding, padding), (padding, padding)),
        rhs_dilation=(dilation, dilation),
        dimension_numbers=("NCHW", "OIHW", "NCHW")) + conv_b.reshape(1, -1, 1, 1)
    mean = jnp.mean(conv, axis=(0, 2, 3), keepdims=True)
    var = jnp.mean((conv - mean) ** 2, axis=(0, 2, 3), keepdims=True)
    norm = (conv - mean) * lax.rsqrt(var + eps)
    branch = jnp.maximum(norm * gamma.reshape(1, -1, 1, 1)
                         + beta.reshape(1, -1, 1, 1), 0.0)
    ident = lax.conv_general_dilated(
        x, nin_w, window_strides=(1, 1), padding=((0, 0), (0, 0)),
        dimension_numbers=("NCHW", "OIHW", "NCHW")) + nin_b.reshape(1, -1, 1, 1)
    return ident + alpha * branch


# ------------------------------------ main ----------------------------------- #

if __name__ == "__main__":
    N, C_in, H, W = 2, 4, 16, 16
    C_out, ksize, padding, dilation = 8, 3, 1, 1

    key = jax.random.PRNGKey(0)
    kx, kcw, kcb, kg, kb, knw, knb, ka = jax.random.split(key, 8)

    x = jax.random.normal(kx, (N, C_in, H, W), dtype=jnp.float32)
    conv_w = 0.1 * jax.random.normal(kcw, (C_out, C_in, ksize, ksize), jnp.float32)
    conv_b = 0.1 * jax.random.normal(kcb, (C_out,), jnp.float32)   # reference only
    gamma = 1.0 + 0.1 * jax.random.normal(kg, (C_out,), jnp.float32)
    beta = 0.1 * jax.random.normal(kb, (C_out,), jnp.float32)
    nin_w = 0.1 * jax.random.normal(knw, (C_out, C_in, 1, 1), jnp.float32)
    nin_b = 0.1 * jax.random.normal(knb, (C_out,), jnp.float32)

    # Case 1: exact module semantics on the first forward -- alpha is lazily
    # created as zeros(1, C_out, 1, W), so the output equals the 1x1 identity.
    alpha0 = jnp.zeros((1, C_out, 1, W), jnp.float32)
    out0 = jax.block_until_ready(
        rezero_forward(x, conv_w, gamma, beta, nin_w, nin_b, alpha0,
                       padding=padding, dilation=dilation))
    ref0 = _reference(x, conv_w, conv_b, gamma, beta, nin_w, nin_b, alpha0,
                      padding=padding, dilation=dilation)
    assert out0.shape == (N, C_out, H, W), out0.shape
    assert jnp.allclose(out0, ref0, atol=1e-3, rtol=1e-3), \
        float(jnp.max(jnp.abs(out0 - ref0)))

    # Case 2: non-zero alpha (trained state) to exercise the scaled branch.
    alpha1 = 0.5 * jax.random.normal(ka, (1, C_out, 1, W), jnp.float32)
    out1 = jax.block_until_ready(
        rezero_forward(x, conv_w, gamma, beta, nin_w, nin_b, alpha1,
                       padding=padding, dilation=dilation))
    ref1 = _reference(x, conv_w, conv_b, gamma, beta, nin_w, nin_b, alpha1,
                      padding=padding, dilation=dilation)
    assert jnp.allclose(out1, ref1, atol=1e-3, rtol=1e-3), \
        float(jnp.max(jnp.abs(out1 - ref1)))

    print("KERNEL_OK")
</pallas_src>

<mosaic_0001>
module attributes {stable_mosaic.version = 11 : i64} {
  func.func @_rezero_fused_kernel(%arg0: i32, %arg1: memref<4x546xf32, #tpu.memory_space<vmem>>, %arg2: memref<16x36xf32, #tpu.memory_space<vmem>>, %arg3: memref<8x19xf32, #tpu.memory_space<vmem>>, %arg4: memref<2x8x256xf32, #tpu.memory_space<vmem>>) attributes {dimension_semantics = [#tpu.dimension_semantics<arbitrary>], iteration_bounds = array<i64: 1>, scalar_prefetch = 0 : i64, scratch_operands = 0 : i64, tpu.core_type = #tpu.core_type<tc>, window_params = [{pipeline_mode = #tpu.pipeline_mode<synchronous>, transform_indices = @transform_0, window_bounds = array<i64: 4, 546>}, {pipeline_mode = #tpu.pipeline_mode<synchronous>, transform_indices = @transform_1, window_bounds = array<i64: 16, 36>}, {pipeline_mode = #tpu.pipeline_mode<synchronous>, transform_indices = @transform_2, window_bounds = array<i64: 8, 19>}, {pipeline_mode = #tpu.pipeline_mode<synchronous>, transform_indices = @transform_3, window_bounds = array<i64: 2, 8, 256>}]} {
    %0 = tpu.iota {dimensions = array<i32: 1>} : vector<1x512xi32>
    %c15_i32 = arith.constant 15 : i32
    %1 = vector.broadcast %c15_i32 : i32 to vector<1x512xi32>
    %2 = arith.andi %0, %1 : vector<1x512xi32>
    %c4_i32 = arith.constant 4 : i32
    %3 = vector.broadcast %c4_i32 : i32 to vector<1x512xi32>
    %4 = arith.shrsi %0, %3 : vector<1x512xi32>
    %c15_i32_0 = arith.constant 15 : i32
    %5 = vector.broadcast %c15_i32_0 : i32 to vector<1x512xi32>
    %6 = arith.andi %4, %5 : vector<1x512xi32>
    %cst = arith.constant 0.000000e+00 : f32
    %7 = vector.broadcast %cst : f32 to vector<16x512xf32>
    %c0 = arith.constant 0 : index
    %c0_1 = arith.constant 0 : index
    %8 = vector.load %arg1[%c0, %c0_1] : memref<4x546xf32, #tpu.memory_space<vmem>>, vector<4x512xf32>
    %c1_i32 = arith.constant 1 : i32
    %9 = vector.broadcast %c1_i32 : i32 to vector<1x512xi32>
    %10 = arith.cmpi sge, %6, %9 : vector<1x512xi32>
    %c1_i32_2 = arith.constant 1 : i32
    %11 = vector.broadcast %c1_i32_2 : i32 to vector<1x512xi32>
    %12 = arith.cmpi sge, %2, %11 : vector<1x512xi32>
    %13 = arith.andi %10, %12 : vector<1x512xi1>
    %cst_3 = arith.constant 0.000000e+00 : f32
    %14 = vector.shape_cast %13 : vector<1x512xi1> to vector<1x512xi1>
    %15 = vector.broadcast %14 : vector<1x512xi1> to vector<4x512xi1>
    %16 = vector.broadcast %cst_3 : f32 to vector<4x512xf32>
    %17 = arith.select %15, %8, %16 : vector<4x512xi1>, vector<4x512xf32>
    %c0_4 = arith.constant 0 : index
    %c0_5 = arith.constant 0 : index
    %18 = vector.load %arg2[%c0_4, %c0_5] : memref<16x36xf32, #tpu.memory_space<vmem>>, vector<16x4xf32>
    %cst_6 = arith.constant dense<0.000000e+00> : vector<16x512xf32>
    %19 = tpu.matmul %18, %17, %cst_6 {dimension_numbers = #tpu.dot_dimension_numbers<[1], [0], [0], [1], [0, 0, 1, 1], [], []>} : vector<16x4xf32>, vector<4x512xf32>, vector<16x512xf32> -> vector<16x512xf32>
    %20 = arith.addf %7, %19 : vector<16x512xf32>
    %c0_7 = arith.constant 0 : index
    %c1 = arith.constant 1 : index
    %21 = vector.load %arg1[%c0_7, %c1] : memref<4x546xf32, #tpu.memory_space<vmem>>, vector<4x512xf32>
    %c1_i32_8 = arith.constant 1 : i32
    %22 = vector.broadcast %c1_i32_8 : i32 to vector<1x512xi32>
    %23 = arith.cmpi sge, %6, %22 : vector<1x512xi32>
    %cst_9 = arith.constant 0.000000e+00 : f32
    %24 = vector.shape_cast %23 : vector<1x512xi1> to vector<1x512xi1>
    %25 = vector.broadcast %24 : vector<1x512xi1> to vector<4x512xi1>
    %26 = vector.broadcast %cst_9 : f32 to vector<4x512xf32>
    %27 = arith.select %25, %21, %26 : vector<4x512xi1>, vector<4x512xf32>
    %c0_10 = arith.constant 0 : index
    %c4 = arith.constant 4 : index
    %28 = vector.load %arg2[%c0_10, %c4] : memref<16x36xf32, #tpu.memory_space<vmem>>, vector<16x4xf32>
    %cst_11 = arith.constant dense<0.000000e+00> : vector<16x512xf32>
    %29 = tpu.matmul %28, %27, %cst_11 {dimension_numbers = #tpu.dot_dimension_numbers<[1], [0], [0], [1], [0, 0, 1, 1], [], []>} : vector<16x4xf32>, vector<4x512xf32>, vector<16x512xf32> -> vector<16x512xf32>
    %30 = arith.addf %20, %29 : vector<16x512xf32>
    %c0_12 = arith.constant 0 : index
    %c2 = arith.constant 2 : index
    %31 = vector.load %arg1[%c0_12, %c2] : memref<4x546xf32, #tpu.memory_space<vmem>>, vector<4x512xf32>
    %c1_i32_13 = arith.constant 1 : i32
    %32 = vector.broadcast %c1_i32_13 : i32 to vector<1x512xi32>
    %33 = arith.cmpi sge, %6, %32 : vector<1x512xi32>
    %c15_i32_14 = arith.constant 15 : i32
    %34 = vector.broadcast %c15_i32_14 : i32 to vector<1x512xi32>
    %35 = arith.cmpi slt, %2, %34 : vector<1x512xi32>
    %36 = arith.andi %33, %35 : vector<1x512xi1>
    %cst_15 = arith.constant 0.000000e+00 : f32
    %37 = vector.shape_cast %36 : vector<1x512xi1> to vector<1x512xi1>
    %38 = vector.broadcast %37 : vector<1x512xi1> to vector<4x512xi1>
    %39 = vector.broadcast %cst_15 : f32 to vector<4x512xf32>
    %40 = arith.select %38, %31, %39 : vector<4x512xi1>, vector<4x512xf32>
    %c0_16 = arith.constant 0 : index
    %c8 = arith.constant 8 : index
    %41 = vector.load %arg2[%c0_16, %c8] : memref<16x36xf32, #tpu.memory_space<vmem>>, vector<16x4xf32>
    %cst_17 = arith.constant dense<0.000000e+00> : vector<16x512xf32>
    %42 = tpu.matmul %41, %40, %cst_17 {dimension_numbers = #tpu.dot_dimension_numbers<[1], [0], [0], [1], [0, 0, 1, 1], [], []>} : vector<16x4xf32>, vector<4x512xf32>, vector<16x512xf32> -> vector<16x512xf32>
    %43 = arith.addf %30, %42 : vector<16x512xf32>
    %c0_18 = arith.constant 0 : index
    %c16 = arith.constant 16 : index
    %44 = vector.load %arg1[%c0_18, %c16] : memref<4x546xf32, #tpu.memory_space<vmem>>, vector<4x512xf32>
    %c1_i32_19 = arith.constant 1 : i32
    %45 = vector.broadcast %c1_i32_19 : i32 to vector<1x512xi32>
    %46 = arith.cmpi sge, %2, %45 : vector<1x512xi32>
    %cst_20 = arith.constant 0.000000e+00 : f32
    %47 = vector.shape_cast %46 : vector<1x512xi1> to vector<1x512xi1>
    %48 = vector.broadcast %47 : vector<1x512xi1> to vector<4x512xi1>
    %49 = vector.broadcast %cst_20 : f32 to vector<4x512xf32>
    %50 = arith.select %48, %44, %49 : vector<4x512xi1>, vector<4x512xf32>
    %c0_21 = arith.constant 0 : index
    %c12 = arith.constant 12 : index
    %51 = vector.load %arg2[%c0_21, %c12] : memref<16x36xf32, #tpu.memory_space<vmem>>, vector<16x4xf32>
    %cst_22 = arith.constant dense<0.000000e+00> : vector<16x512xf32>
    %52 = tpu.matmul %51, %50, %cst_22 {dimension_numbers = #tpu.dot_dimension_numbers<[1], [0], [0], [1], [0, 0, 1, 1], [], []>} : vector<16x4xf32>, vector<4x512xf32>, vector<16x512xf32> -> vector<16x512xf32>
    %53 = arith.addf %43, %52 : vector<16x512xf32>
    %c0_23 = arith.constant 0 : index
    %c17 = arith.constant 17 : index
    %54 = vector.load %arg1[%c0_23, %c17] : memref<4x546xf32, #tpu.memory_space<vmem>>, vector<4x512xf32>
    %c0_24 = arith.constant 0 : index
    %c16_25 = arith.constant 16 : index
    %55 = vector.load %arg2[%c0_24, %c16_25] : memref<16x36xf32, #tpu.memory_space<vmem>>, vector<16x4xf32>
    %cst_26 = arith.constant dense<0.000000e+00> : vector<16x512xf32>
    %56 = tpu.matmul %55, %54, %cst_26 {dimension_numbers = #tpu.dot_dimension_numbers<[1], [0], [0], [1], [0, 0, 1, 1], [], []>} : vector<16x4xf32>, vector<4x512xf32>, vector<16x512xf32> -> vector<16x512xf32>
    %57 = arith.addf %53, %56 : vector<16x512xf32>
    %c0_27 = arith.constant 0 : index
    %c18 = arith.constant 18 : index
    %58 = vector.load %arg1[%c0_27, %c18] : memref<4x546xf32, #tpu.memory_space<vmem>>, vector<4x512xf32>
    %c15_i32_28 = arith.constant 15 : i32
    %59 = vector.broadcast %c15_i32_28 : i32 to vector<1x512xi32>
    %60 = arith.cmpi slt, %2, %59 : vector<1x512xi32>
    %cst_29 = arith.constant 0.000000e+00 : f32
    %61 = vector.shape_cast %60 : vector<1x512xi1> to vector<1x512xi1>
    %62 = vector.broadcast %61 : vector<1x512xi1> to vector<4x512xi1>
    %63 = vector.broadcast %cst_29 : f32 to vector<4x512xf32>
    %64 = arith.select %62, %58, %63 : vector<4x512xi1>, vector<4x512xf32>
    %c0_30 = arith.constant 0 : index
    %c20 = arith.constant 20 : index
    %65 = vector.load %arg2[%c0_30, %c20] : memref<16x36xf32, #tpu.memory_space<vmem>>, vector<16x4xf32>
    %cst_31 = arith.constant dense<0.000000e+00> : vector<16x512xf32>
    %66 = tpu.matmul %65, %64, %cst_31 {dimension_numbers = #tpu.dot_dimension_numbers<[1], [0], [0], [1], [0, 0, 1, 1], [], []>} : vector<16x4xf32>, vector<4x512xf32>, vector<16x512xf32> -> vector<16x512xf32>
    %67 = arith.addf %57, %66 : vector<16x512xf32>
    %c0_32 = arith.constant 0 : index
    %c32 = arith.constant 32 : index
    %68 = vector.load %arg1[%c0_32, %c32] : memref<4x546xf32, #tpu.memory_space<vmem>>, vector<4x512xf32>
    %c15_i32_33 = arith.constant 15 : i32
    %69 = vector.broadcast %c15_i32_33 : i32 to vector<1x512xi32>
    %70 = arith.cmpi slt, %6, %69 : vector<1x512xi32>
    %c1_i32_34 = arith.constant 1 : i32
    %71 = vector.broadcast %c1_i32_34 : i32 to vector<1x512xi32>
    %72 = arith.cmpi sge, %2, %71 : vector<1x512xi32>
    %73 = arith.andi %70, %72 : vector<1x512xi1>
    %cst_35 = arith.constant 0.000000e+00 : f32
    %74 = vector.shape_cast %73 : vector<1x512xi1> to vector<1x512xi1>
    %75 = vector.broadcast %74 : vector<1x512xi1> to vector<4x512xi1>
    %76 = vector.broadcast %cst_35 : f32 to vector<4x512xf32>
    %77 = arith.select %75, %68, %76 : vector<4x512xi1>, vector<4x512xf32>
    %c0_36 = arith.constant 0 : index
    %c24 = arith.constant 24 : index
    %78 = vector.load %arg2[%c0_36, %c24] : memref<16x36xf32, #tpu.memory_space<vmem>>, vector<16x4xf32>
    %cst_37 = arith.constant dense<0.000000e+00> : vector<16x512xf32>
    %79 = tpu.matmul %78, %77, %cst_37 {dimension_numbers = #tpu.dot_dimension_numbers<[1], [0], [0], [1], [0, 0, 1, 1], [], []>} : vector<16x4xf32>, vector<4x512xf32>, vector<16x512xf32> -> vector<16x512xf32>
    %80 = arith.addf %67, %79 : vector<16x512xf32>
    %c0_38 = arith.constant 0 : index
    %c33 = arith.constant 33 : index
    %81 = vector.load %arg1[%c0_38, %c33] : memref<4x546xf32, #tpu.memory_space<vmem>>, vector<4x512xf32>
    %c15_i32_39 = arith.constant 15 : i32
    %82 = vector.broadcast %c15_i32_39 : i32 to vector<1x512xi32>
    %83 = arith.cmpi slt, %6, %82 : vector<1x512xi32>
    %cst_40 = arith.constant 0.000000e+00 : f32
    %84 = vector.shape_cast %83 : vector<1x512xi1> to vector<1x512xi1>
    %85 = vector.broadcast %84 : vector<1x512xi1> to vector<4x512xi1>
    %86 = vector.broadcast %cst_40 : f32 to vector<4x512xf32>
    %87 = arith.select %85, %81, %86 : vector<4x512xi1>, vector<4x512xf32>
    %c0_41 = arith.constant 0 : index
    %c28 = arith.constant 28 : index
    %88 = vector.load %arg2[%c0_41, %c28] : memref<16x36xf32, #tpu.memory_space<vmem>>, vector<16x4xf32>
    %cst_42 = arith.constant dense<0.000000e+00> : vector<16x512xf32>
    %89 = tpu.matmul %88, %87, %cst_42 {dimension_numbers = #tpu.dot_dimension_numbers<[1], [0], [0], [1], [0, 0, 1, 1], [], []>} : vector<16x4xf32>, vector<4x512xf32>, vector<16x512xf32> -> vector<16x512xf32>
    %90 = arith.addf %80, %89 : vector<16x512xf32>
    %c0_43 = arith.constant 0 : index
    %c34 = arith.constant 34 : index
    %91 = vector.load %arg1[%c0_43, %c34] : memref<4x546xf32, #tpu.memory_space<vmem>>, vector<4x512xf32>
    %c15_i32_44 = arith.constant 15 : i32
    %92 = vector.broadcast %c15_i32_44 : i32 to vector<1x512xi32>
    %93 = arith.cmpi slt, %6, %92 : vector<1x512xi32>
    %c15_i32_45 = arith.constant 15 : i32
    %94 = vector.broadcast %c15_i32_45 : i32 to vector<1x512xi32>
    %95 = arith.cmpi slt, %2, %94 : vector<1x512xi32>
    %96 = arith.andi %93, %95 : vector<1x512xi1>
    %cst_46 = arith.constant 0.000000e+00 : f32
    %97 = vector.shape_cast %96 : vector<1x512xi1> to vector<1x512xi1>
    %98 = vector.broadcast %97 : vector<1x512xi1> to vector<4x512xi1>
    %99 = vector.broadcast %cst_46 : f32 to vector<4x512xf32>
    %100 = arith.select %98, %91, %99 : vector<4x512xi1>, vector<4x512xf32>
    %c0_47 = arith.constant 0 : index
    %c32_48 = arith.constant 32 : index
    %101 = vector.load %arg2[%c0_47, %c32_48] : memref<16x36xf32, #tpu.memory_space<vmem>>, vector<16x4xf32>
    %cst_49 = arith.constant dense<0.000000e+00> : vector<16x512xf32>
    %102 = tpu.matmul %101, %100, %cst_49 {dimension_numbers = #tpu.dot_dimension_numbers<[1], [0], [0], [1], [0, 0, 1, 1], [], []>} : vector<16x4xf32>, vector<4x512xf32>, vector<16x512xf32> -> vector<16x512xf32>
    %103 = arith.addf %90, %102 : vector<16x512xf32>
    %104 = vector.extract_strided_slice %103 {offsets = [0, 0], sizes = [8, 512], strides = [1, 1]} : vector<16x512xf32> to vector<8x512xf32>
    %105 = vector.extract_strided_slice %103 {offsets = [8, 0], sizes = [8, 512], strides = [1, 1]} : vector<16x512xf32> to vector<8x512xf32>
    %c0_50 = arith.constant 0 : index
    %c2_51 = arith.constant 2 : index
    %106 = vector.load %arg3[%c0_50, %c2_51] : memref<8x19xf32, #tpu.memory_space<vmem>>, vector<8x1xf32>
    %107 = vector.broadcast %106 : vector<8x1xf32> to vector<8x512xf32>
    %108 = arith.addf %105, %107 : vector<8x512xf32>
    %cst_52 = arith.constant dense<0.000000e+00> : vector<8xf32>
    %109 = vector.multi_reduction <add>, %104, %cst_52 [1] : vector<8x512xf32> to vector<8xf32>
    %110 = vector.shape_cast %109 : vector<8xf32> to vector<8x1xf32>
    %cst_53 = arith.constant 0.001953125 : f32
    %111 = vector.broadcast %cst_53 : f32 to vector<8x1xf32>
    %112 = arith.mulf %110, %111 : vector<8x1xf32>
    %113 = vector.broadcast %112 : vector<8x1xf32> to vector<8x512xf32>
    %114 = arith.subf %104, %113 : vector<8x512xf32>
    %115 = arith.mulf %114, %114 : vector<8x512xf32>
    %cst_54 = arith.constant dense<0.000000e+00> : vector<8xf32>
    %116 = vector.multi_reduction <add>, %115, %cst_54 [1] : vector<8x512xf32> to vector<8xf32>
    %117 = vector.shape_cast %116 : vector<8xf32> to vector<8x1xf32>
    %cst_55 = arith.constant 0.001953125 : f32
    %118 = vector.broadcast %cst_55 : f32 to vector<8x1xf32>
    %119 = arith.mulf %117, %118 : vector<8x1xf32>
    %c0_56 = arith.constant 0 : index
    %c0_57 = arith.constant 0 : index
    %120 = vector.load %arg3[%c0_56, %c0_57] : memref<8x19xf32, #tpu.memory_space<vmem>>, vector<8x1xf32>
    %cst_58 = arith.constant 9.99999974E-6 : f32
    %121 = vector.broadcast %cst_58 : f32 to vector<8x1xf32>
    %122 = arith.addf %119, %121 : vector<8x1xf32>
    %123 = math.rsqrt %122 : vector<8x1xf32>
    %124 = arith.mulf %120, %123 : vector<8x1xf32>
    %125 = vector.broadcast %124 : vector<8x1xf32> to vector<8x512xf32>
    %126 = arith.mulf %114, %125 : vector<8x512xf32>
    %c0_59 = arith.constant 0 : index
    %c1_60 = arith.constant 1 : index
    %127 = vector.load %arg3[%c0_59, %c1_60] : memref<8x19xf32, #tpu.memory_space<vmem>>, vector<8x1xf32>
    %128 = vector.broadcast %127 : vector<8x1xf32> to vector<8x512xf32>
    %129 = arith.addf %126, %128 : vector<8x512xf32>
    %cst_61 = arith.constant 0.000000e+00 : f32
    %130 = vector.broadcast %cst_61 : f32 to vector<8x512xf32>
    %131 = arith.maximumf %129, %130 : vector<8x512xf32>
    %132 = tpu.iota {dimensions = array<i32: 0>} : vector<16x512xi32>
    %133 = tpu.iota {dimensions = array<i32: 1>} : vector<16x512xi32>
    %c15_i32_62 = arith.constant 15 : i32
    %134 = vector.broadcast %c15_i32_62 : i32 to vector<16x512xi32>
    %135 = arith.andi %133, %134 : vector<16x512xi32>
    %136 = arith.cmpi eq, %132, %135 : vector<16x512xi32>
    %137 = arith.extui %136 : vector<16x512xi1> to vector<16x512xi32>
    %138 = arith.sitofp %137 : vector<16x512xi32> to vector<16x512xf32>
    %c0_63 = arith.constant 0 : index
    %c3 = arith.constant 3 : index
    %139 = vector.load %arg3[%c0_63, %c3] : memref<8x19xf32, #tpu.memory_space<vmem>>, vector<8x16xf32>
    %cst_64 = arith.constant dense<0.000000e+00> : vector<8x512xf32>
    %140 = tpu.matmul %139, %138, %cst_64 {dimension_numbers = #tpu.dot_dimension_numbers<[1], [0], [0], [1], [0, 0, 1, 1], [], []>} : vector<8x16xf32>, vector<16x512xf32>, vector<8x512xf32> -> vector<8x512xf32>
    %141 = arith.mulf %140, %131 : vector<8x512xf32>
    %142 = arith.addf %108, %141 : vector<8x512xf32>
    %143 = vector.extract_strided_slice %142 {offsets = [0, 0], sizes = [8, 256], strides = [1, 1]} : vector<8x512xf32> to vector<8x256xf32>
    %c0_65 = arith.constant 0 : index
    %c0_66 = arith.constant 0 : index
    %c0_67 = arith.constant 0 : index
    %144 = vector.load %arg4[%c0_65, %c0_66, %c0_67] : memref<2x8x256xf32, #tpu.memory_space<vmem>>, vector<1x8x256xf32>
    %145 = vector.shape_cast %144 : vector<1x8x256xf32> to vector<8x256xf32>
    %146 = vector.shape_cast %143 : vector<8x256xf32> to vector<1x8x256xf32>
    tpu.vector_store %arg4[%c0_65, %c0_66, %c0_67], %146 {strides = array<i32>} : memref<2x8x256xf32, #tpu.memory_space<vmem>>, vector<1x8x256xf32>,
    %147 = vector.extract_strided_slice %142 {offsets = [0, 256], sizes = [8, 256], strides = [1, 1]} : vector<8x512xf32> to vector<8x256xf32>
    %c1_68 = arith.constant 1 : index
    %c0_69 = arith.constant 0 : index
    %c0_70 = arith.constant 0 : index
    %148 = vector.load %arg4[%c1_68, %c0_69, %c0_70] : memref<2x8x256xf32, #tpu.memory_space<vmem>>, vector<1x8x256xf32>
    %149 = vector.shape_cast %148 : vector<1x8x256xf32> to vector<8x256xf32>
    %150 = vector.shape_cast %147 : vector<8x256xf32> to vector<1x8x256xf32>
    tpu.vector_store %arg4[%c1_68, %c0_69, %c0_70], %150 {strides = array<i32>} : memref<2x8x256xf32, #tpu.memory_space<vmem>>, vector<1x8x256xf32>,
    return
  }
  func.func @transform_0(%arg0: i32) -> (i32, i32) {
    %c0_i32 = arith.constant 0 : i32
    %c0_i32_0 = arith.constant 0 : i32
    %c0_i32_1 = arith.constant 0 : i32
    return %c0_i32, %c0_i32_0 : i32, i32
  }
  func.func @transform_1(%arg0: i32) -> (i32, i32) {
    %c0_i32 = arith.constant 0 : i32
    %c0_i32_0 = arith.constant 0 : i32
    %c0_i32_1 = arith.constant 0 : i32
    return %c0_i32, %c0_i32_0 : i32, i32
  }
  func.func @transform_2(%arg0: i32) -> (i32, i32) {
    %c0_i32 = arith.constant 0 : i32
    %c0_i32_0 = arith.constant 0 : i32
    %c0_i32_1 = arith.constant 0 : i32
    return %c0_i32, %c0_i32_0 : i32, i32
  }
  func.func @transform_3(%arg0: i32) -> (i32, i32, i32) {
    %c0_i32 = arith.constant 0 : i32
    %c0_i32_0 = arith.constant 0 : i32
    %c0_i32_1 = arith.constant 0 : i32
    %c0_i32_2 = arith.constant 0 : i32
    return %c0_i32, %c0_i32_0, %c0_i32_1 : i32, i32, i32
  }
}

</mosaic_0001>

<llo_original>
// kernel: rezero_forward.1
$region0: #{rezero_forward.1}
  #allocation0 [shape = 'u32[]', space=smem, size = 0x4, offset = 0x4, fixed_abs, tag = 'smem constant byte address 0x4 - core index']
  #allocation1 [shape = 'u32[144,128]{1,0:T(1,128)}', space=vmem, size = 0x12000, scoped, tag = 'internal scratch']
  %s0 = inlined_call_operand.vmem [shape: f32[4,546], index: 0, kind: input, shape index: {}]
  %s1 = inlined_call_operand.vmem [shape: f32[16,36], index: 1, kind: input, shape index: {}]
  %s2 = inlined_call_operand.vmem [shape: f32[8,19], index: 2, kind: input, shape index: {}]
  %s3 = inlined_call_operand.vmem [shape: f32[2,8,256], index: 3, kind: output, shape index: {}]
  %s4 = sld [smem:[#allocation0]]
  $region22: #{rezero_forward.1} parent=0
    _
  %s6 = ssub.s32 1, %s4
  %s7 = scalar_select 0, %s6, %s4
  // Predicated region
  $region2: #{rezero_forward.1} parent=0 // pred_check
    _
  $region3: #{rezero_forward.1} parent=0 // pred_check_branch
    %9 = sbr.rel (0) target = $region5
  $region4: #{rezero_forward.1} parent=0 // pred_region
    _
  $region5: #{rezero_forward.1} parent=0 // pred_fallthru
    _
  // Predicated region
  $region6: #{rezero_forward.1} parent=0 // pred_check
    _
  $region7: #{rezero_forward.1} parent=0 // pred_check_branch
    %11 = sbr.rel (0) target = $region9
  $region8: #{rezero_forward.1} parent=0 // pred_region
    _
  $region9: #{rezero_forward.1} parent=0 // pred_fallthru
    _
  // Predicated region
  $region10: #{rezero_forward.1} parent=0 // pred_check
    _
  $region11: #{rezero_forward.1} parent=0 // pred_check_branch
    %13 = sbr.rel (0) target = $region13
  $region12: #{rezero_forward.1} parent=0 // pred_region
    _
  $region13: #{rezero_forward.1} parent=0 // pred_fallthru
    _
  %v14 = vlaneseq
  %v15 = vand.u32 %v14, 127
  %v16 = vadd.s32 %v15, 128
  %v17 = vadd.s32 %v15, 256
  %v18 = vadd.s32 %v15, 384
  %v19 = vand.u32 %v15, 15
  %v20 = vand.u32 %v16, 15
  %v21 = vand.u32 %v17, 15
  %v22 = vand.u32 %v18, 15
  %v23 = vshra.s32 %v15, 4
  %v24 = vshra.s32 %v16, 4
  %v25 = vshra.s32 %v17, 4
  %v26 = vshra.s32 %v18, 4
  %v27 = vand.u32 %v23, 15
  %v28 = vand.u32 %v24, 15
  %v29 = vand.u32 %v25, 15
  %v30 = vand.u32 %v26, 15
  %v31 = vld [vmem:[%s0] sm:$0xff]
  %v32 = vld [vmem:[%s0 + $0x8] sm:$0xff]
  %vm33 = vcmp.ge.s32.totalorder %v27, 1
  %vm34 = vcmp.ge.s32.totalorder %v28, 1
  %vm35 = vcmp.ge.s32.totalorder %v29, 1
  %vm36 = vcmp.ge.s32.totalorder %v30, 1
  %vm37 = vcmp.ge.s32.totalorder %v19, 1
  %vm38 = vcmp.ge.s32.totalorder %v20, 1
  %vm39 = vcmp.ge.s32.totalorder %v21, 1
  %vm40 = vcmp.ge.s32.totalorder %v22, 1
  %vm41 = vmand %vm33, %vm37
  %vm42 = vmand %vm34, %vm38
  %vm43 = vmand %vm35, %vm39
  %vm44 = vmand %vm36, %vm40
  %v45 = vsel %vm41, 1, 0
  %v46 = vsel %vm42, 1, 0
  %v47 = vsel %vm43, 1, 0
  %v48 = vsel %vm44, 1, 0
  %vm49 = vcmp.eq.s32.totalorder %v45, 1
  %vm50 = vcmp.eq.s32.totalorder %v46, 1
  %vm51 = vcmp.eq.s32.totalorder %v47, 1
  %vm52 = vcmp.eq.s32.totalorder %v48, 1
  %v55 = vcombine.high %v31, %v31
  %v56 = vcombine.high %v32, %v32
  %v59 = vsel %vm49, %v31, 0.0
  %v60 = vsel %vm50, %v55, 0.0
  %v61 = vsel %vm51, %v32, 0.0
  %v62 = vsel %vm52, %v56, 0.0
  %v63 = vld [vmem:[%s1] sm:$0xff]
  %v64 = vld [vmem:[%s1 + $0x8] sm:$0xff]
  %v65 = vld [vmem:[%s0 + $0x10] sm:$0xf]
  %v66 = vsel %vm33, 1, 0
  %v67 = vsel %vm34, 1, 0
  %v68 = vsel %vm35, 1, 0
  %v69 = vsel %vm36, 1, 0
  %vm70 = vcmp.eq.s32.totalorder %v66, 1
  %vm71 = vcmp.eq.s32.totalorder %v67, 1
  %vm72 = vcmp.eq.s32.totalorder %v68, 1
  %vm73 = vcmp.eq.s32.totalorder %v69, 1
  %75 = vrot.lane.b32.xlu0 %v31, 127
  %v76 = vpop.permute.xlu0 %75
  %77 = vrot.lane.b32.xlu0 %v55, 127
  %v78 = vpop.permute.xlu0 %77
  %79 = vrot.lane.b32.xlu0 %v32, 127
  %v80 = vpop.permute.xlu0 %79
  %81 = vrot.lane.b32.xlu0 %v56, 127
  %v82 = vpop.permute.xlu0 %81
  %83 = vrot.lane.b32.xlu0 %v65, 127
  %v84 = vpop.permute.xlu0 %83
  %vm85 = vcmask 1039360
  %v86 = vsel %vm85, %v76, %v78
  %v87 = vsel %vm85, %v78, %v80
  %v88 = vsel %vm85, %v80, %v82
  %v89 = vsel %vm85, %v82, %v84
  %v94 = vsel %vm70, %v86, 0.0
  %v95 = vsel %vm71, %v87, 0.0
  %v96 = vsel %vm72, %v88, 0.0
  %v97 = vsel %vm73, %v89, 0.0
  %100 = vrot.lane.b32.xlu0 %v63, 124
  %v101 = vpop.permute.xlu0 %100
  %102 = vrot.lane.b32.xlu0 %v64, 124
  %v103 = vpop.permute.xlu0 %102
  %vm104 = vcmask 31744
  %v105 = vsel %vm104, %v101, 0
  %v107 = vsel %vm104, %v103, 0
  %vm109 = vcmask 1043456
  %v111 = vsel %vm109, %v94, 0
  %v114 = vsel %vm109, %v95, 0
  %v117 = vsel %vm109, %v96, 0
  %v120 = vsel %vm109, %v97, 0
  %122 = vmatprep.subr.mxu0 0.0
  %123 = vmatpush1.msra.mxu0 0.0
  %124 = vmatprep.subr.mxu0 0.0
  %125 = vmatpush1.msra.mxu0 0.0
  %126 = vmatprep.subr.mxu0 0.0
  %127 = vmatpush1.msra.mxu0 0.0
  %128 = vmatprep.subr.mxu0 0.0
  %129 = vmatpush1.msra.mxu0 0.0
  %130 = vmatprep.subr.mxu0 0.0
  %131 = vmatpush1.msra.mxu0 0.0
  %132 = vmatprep.subr.mxu0 0.0
  %133 = vmatpush1.msra.mxu0 0.0
  %134 = vmatprep.subr.mxu0 0.0
  %135 = vmatpush1.msra.mxu0 0.0
  %136 = vmatprep.subr.mxu0 0.0
  %137 = vmatpush1.msra.mxu0 0.0
  %138 = vmatprep.subr.mxu0 0.0
  %139 = vmatpush1.msra.mxu0 0.0
  %140 = vmatprep.subr.mxu0 0.0
  %141 = vmatpush1.msra.mxu0 0.0
  %142 = vmatprep.subr.mxu0 0.0
  %143 = vmatpush1.msra.mxu0 0.0
  %144 = vmatprep.subr.mxu0 0.0
  %145 = vmatpush1.msra.mxu0 0.0
  %146 = vmatprep.subr.mxu0 0.0
  %147 = vmatpush1.msra.mxu0 0.0
  %148 = vmatprep.subr.mxu0 0.0
  %149 = vmatpush1.msra.mxu0 0.0
  %150 = vmatprep.subr.mxu0 0.0
  %151 = vmatpush1.msra.mxu0 0.0
  %152 = vmatprep.subr.mxu0 %v114
  %153 = vmatpush1.msra.mxu0 %v111
  %154 = vmatprep.subr.mxu0 0.0
  %155 = vmatpush2.msra.mxu0 0.0
  %156 = vmatprep.subr.mxu0 0.0
  %157 = vmatpush2.msra.mxu0 0.0
  %158 = vmatprep.subr.mxu0 0.0
  %159 = vmatpush2.msra.mxu0 0.0
  %160 = vmatprep.subr.mxu0 0.0
  %161 = vmatpush2.msra.mxu0 0.0
  %162 = vmatprep.subr.mxu0 0.0
  %163 = vmatpush2.msra.mxu0 0.0
  %164 = vmatprep.subr.mxu0 0.0
  %165 = vmatpush2.msra.mxu0 0.0
  %166 = vmatprep.subr.mxu0 0.0
  %167 = vmatpush2.msra.mxu0 0.0
  %168 = vmatprep.subr.mxu0 0.0
  %169 = vmatpush2.msra.mxu0 0.0
  %170 = vmatprep.subr.mxu0 0.0
  %171 = vmatpush2.msra.mxu0 0.0
  %172 = vmatprep.subr.mxu0 0.0
  %173 = vmatpush2.msra.mxu0 0.0
  %174 = vmatprep.subr.mxu0 0.0
  %175 = vmatpush2.msra.mxu0 0.0
  %176 = vmatprep.subr.mxu0 0.0
  %177 = vmatpush2.msra.mxu0 0.0
  %178 = vmatprep.subr.mxu0 0.0
  %179 = vmatpush2.msra.mxu0 0.0
  %180 = vmatprep.subr.mxu0 0.0
  %181 = vmatpush2.msra.mxu0 0.0
  %182 = vmatprep.subr.mxu0 0.0
  %183 = vmatpush2.msra.mxu0 0.0
  %184 = vmatprep.subr.mxu0 0.0
  %185 = vmatpush2.msra.mxu0 0.0
  %186 = vmatprep.mubr.f32.mxu0 0.0
  %187 = vmatmul.mubr.f32.gmra.mxu0 %v105
  %v188 = vpop.f32.mrf.mxu0
  %v189 = vadd.f32 0.0, %v188
  %v190 = vpop.f32.mrf.mxu0
  %v191 = vadd.f32 0.0, %v190
  %192 = vmatprep.mubr.f32.mxu0 0.0
  %193 = vmatmul.mubr.f32.gmra.mxu0 %v107
  %v194 = vpop.f32.mrf.mxu0
  %v195 = vadd.f32 0.0, %v194
  %v196 = vpop.f32.mrf.mxu0
  %v197 = vadd.f32 0.0, %v196
  %198 = vdwg.mxu0
  %199 = vmatprep.subr.mxu0 0.0
  %200 = vmatpush1.msra.mxu0 0.0
  %201 = vmatprep.subr.mxu0 0.0
  %202 = vmatpush1.msra.mxu0 0.0
  %203 = vmatprep.subr.mxu0 0.0
  %204 = vmatpush1.msra.mxu0 0.0
  %205 = vmatprep.subr.mxu0 0.0
  %206 = vmatpush1.msra.mxu0 0.0
  %207 = vmatprep.subr.mxu0 0.0
  %208 = vmatpush1.msra.mxu0 0.0
  %209 = vmatprep.subr.mxu0 0.0
  %210 = vmatpush1.msra.mxu0 0.0
  %211 = vmatprep.subr.mxu0 0.0
  %212 = vmatpush1.msra.mxu0 0.0
  %213 = vmatprep.subr.mxu0 0.0
  %214 = vmatpush1.msra.mxu0 0.0
  %215 = vmatprep.subr.mxu0 0.0
  %216 = vmatpush1.msra.mxu0 0.0
  %217 = vmatprep.subr.mxu0 0.0
  %218 = vmatpush1.msra.mxu0 0.0
  %219 = vmatprep.subr.mxu0 0.0
  %220 = vmatpush1.msra.mxu0 0.0
  %221 = vmatprep.subr.mxu0 0.0
  %222 = vmatpush1.msra.mxu0 0.0
  %223 = vmatprep.subr.mxu0 0.0
  %224 = vmatpush1.msra.mxu0 0.0
  %225 = vmatprep.subr.mxu0 0.0
  %226 = vmatpush1.msra.mxu0 0.0
  %227 = vmatprep.subr.mxu0 0.0
  %228 = vmatpush1.msra.mxu0 0.0
  %229 = vmatprep.subr.mxu0 %v120
  %230 = vmatpush1.msra.mxu0 %v117
  %231 = vmatprep.subr.mxu0 0.0
  %232 = vmatpush2.msra.mxu0 0.0
  %233 = vmatprep.subr.mxu0 0.0
  %234 = vmatpush2.msra.mxu0 0.0
  %235 = vmatprep.subr.mxu0 0.0
  %236 = vmatpush2.msra.mxu0 0.0
  %237 = vmatprep.subr.mxu0 0.0
  %238 = vmatpush2.msra.mxu0 0.0
  %239 = vmatprep.subr.mxu0 0.0
  %240 = vmatpush2.msra.mxu0 0.0
  %241 = vmatprep.subr.mxu0 0.0
  %242 = vmatpush2.msra.mxu0 0.0
  %243 = vmatprep.subr.mxu0 0.0
  %244 = vmatpush2.msra.mxu0 0.0
  %245 = vmatprep.subr.mxu0 0.0
  %246 = vmatpush2.msra.mxu0 0.0
  %247 = vmatprep.subr.mxu0 0.0
  %248 = vmatpush2.msra.mxu0 0.0
  %249 = vmatprep.subr.mxu0 0.0
  %250 = vmatpush2.msra.mxu0 0.0
  %251 = vmatprep.subr.mxu0 0.0
  %252 = vmatpush2.msra.mxu0 0.0
  %253 = vmatprep.subr.mxu0 0.0
  %254 = vmatpush2.msra.mxu0 0.0
  %255 = vmatprep.subr.mxu0 0.0
  %256 = vmatpush2.msra.mxu0 0.0
  %257 = vmatprep.subr.mxu0 0.0
  %258 = vmatpush2.msra.mxu0 0.0
  %259 = vmatprep.subr.mxu0 0.0
  %260 = vmatpush2.msra.mxu0 0.0
  %261 = vmatprep.subr.mxu0 0.0
  %262 = vmatpush2.msra.mxu0 0.0
  %263 = vmatprep.mubr.f32.mxu0 0.0
  %264 = vmatmul.mubr.f32.gmra.mxu0 %v105
  %v265 = vpop.f32.mrf.mxu0
  %v266 = vadd.f32 0.0, %v265
  %v267 = vpop.f32.mrf.mxu0
  %v268 = vadd.f32 0.0, %v267
  %269 = vmatprep.mubr.f32.mxu0 0.0
  %270 = vmatmul.mubr.f32.gmra.mxu0 %v107
  %v271 = vpop.f32.mrf.mxu0
  %v272 = vadd.f32 0.0, %v271
  %v273 = vpop.f32.mrf.mxu0
  %v274 = vadd.f32 0.0, %v273
  %275 = vdwg.mxu0
  %v276 = vsel %vm104, %v63, 0
  %v278 = vsel %vm104, %v64, 0
  %v281 = vsel %vm109, %v59, 0
  %v284 = vsel %vm109, %v60, 0
  %v287 = vsel %vm109, %v61, 0
  %v290 = vsel %vm109, %v62, 0
  %292 = vmatprep.subr.mxu0 0.0
  %293 = vmatpush1.msra.mxu0 0.0
  %294 = vmatprep.subr.mxu0 0.0
  %295 = vmatpush1.msra.mxu0 0.0
  %296 = vmatprep.subr.mxu0 0.0
  %297 = vmatpush1.msra.mxu0 0.0
  %298 = vmatprep.subr.mxu0 0.0
  %299 = vmatpush1.msra.mxu0 0.0
  %300 = vmatprep.subr.mxu0 0.0
  %301 = vmatpush1.msra.mxu0 0.0
  %302 = vmatprep.subr.mxu0 0.0
  %303 = vmatpush1.msra.mxu0 0.0
  %304 = vmatprep.subr.mxu0 0.0
  %305 = vmatpush1.msra.mxu0 0.0
  %306 = vmatprep.subr.mxu0 0.0
  %307 = vmatpush1.msra.mxu0 0.0
  %308 = vmatprep.subr.mxu0 0.0
  %309 = vmatpush1.msra.mxu0 0.0
  %310 = vmatprep.subr.mxu0 0.0
  %311 = vmatpush1.msra.mxu0 0.0
  %312 = vmatprep.subr.mxu0 0.0
  %313 = vmatpush1.msra.mxu0 0.0
  %314 = vmatprep.subr.mxu0 0.0
  %315 = vmatpush1.msra.mxu0 0.0
  %316 = vmatprep.subr.mxu0 0.0
  %317 = vmatpush1.msra.mxu0 0.0
  %318 = vmatprep.subr.mxu0 0.0
  %319 = vmatpush1.msra.mxu0 0.0
  %320 = vmatprep.subr.mxu0 0.0
  %321 = vmatpush1.msra.mxu0 0.0
  %322 = vmatprep.subr.mxu0 %v284
  %323 = vmatpush1.msra.mxu0 %v281
  %324 = vmatprep.subr.mxu0 0.0
  %325 = vmatpush2.msra.mxu0 0.0
  %326 = vmatprep.subr.mxu0 0.0
  %327 = vmatpush2.msra.mxu0 0.0
  %328 = vmatprep.subr.mxu0 0.0
  %329 = vmatpush2.msra.mxu0 0.0
  %330 = vmatprep.subr.mxu0 0.0
  %331 = vmatpush2.msra.mxu0 0.0
  %332 = vmatprep.subr.mxu0 0.0
  %333 = vmatpush2.msra.mxu0 0.0
  %334 = vmatprep.subr.mxu0 0.0
  %335 = vmatpush2.msra.mxu0 0.0
  %336 = vmatprep.subr.mxu0 0.0
  %337 = vmatpush2.msra.mxu0 0.0
  %338 = vmatprep.subr.mxu0 0.0
  %339 = vmatpush2.msra.mxu0 0.0
  %340 = vmatprep.subr.mxu0 0.0
  %341 = vmatpush2.msra.mxu0 0.0
  %342 = vmatprep.subr.mxu0 0.0
  %343 = vmatpush2.msra.mxu0 0.0
  %344 = vmatprep.subr.mxu0 0.0
  %345 = vmatpush2.msra.mxu0 0.0
  %346 = vmatprep.subr.mxu0 0.0
  %347 = vmatpush2.msra.mxu0 0.0
  %348 = vmatprep.subr.mxu0 0.0
  %349 = vmatpush2.msra.mxu0 0.0
  %350 = vmatprep.subr.mxu0 0.0
  %351 = vmatpush2.msra.mxu0 0.0
  %352 = vmatprep.subr.mxu0 0.0
  %353 = vmatpush2.msra.mxu0 0.0
  %354 = vmatprep.subr.mxu0 0.0
  %355 = vmatpush2.msra.mxu0 0.0
  %356 = vmatprep.mubr.f32.mxu0 0.0
  %357 = vmatmul.mubr.f32.gmra.mxu0 %v276
  %v358 = vpop.f32.mrf.mxu0
  %v359 = vadd.f32 %v189, %v358
  %v360 = vpop.f32.mrf.mxu0
  %v361 = vadd.f32 %v191, %v360
  %362 = vmatprep.mubr.f32.mxu0 0.0
  %363 = vmatmul.mubr.f32.gmra.mxu0 %v278
  %v364 = vpop.f32.mrf.mxu0
  %v365 = vadd.f32 %v195, %v364
  %v366 = vpop.f32.mrf.mxu0
  %v367 = vadd.f32 %v197, %v366
  %368 = vdwg.mxu0
  %369 = vmatprep.subr.mxu0 0.0
  %370 = vmatpush1.msra.mxu0 0.0
  %371 = vmatprep.subr.mxu0 0.0
  %372 = vmatpush1.msra.mxu0 0.0
  %373 = vmatprep.subr.mxu0 0.0
  %374 = vmatpush1.msra.mxu0 0.0
  %375 = vmatprep.subr.mxu0 0.0
  %376 = vmatpush1.msra.mxu0 0.0
  %377 = vmatprep.subr.mxu0 0.0
  %378 = vmatpush1.msra.mxu0 0.0
  %379 = vmatprep.subr.mxu0 0.0
  %380 = vmatpush1.msra.mxu0 0.0
  %381 = vmatprep.subr.mxu0 0.0
  %382 = vmatpush1.msra.mxu0 0.0
  %383 = vmatprep.subr.mxu0 0.0
  %384 = vmatpush1.msra.mxu0 0.0
  %385 = vmatprep.subr.mxu0 0.0
  %386 = vmatpush1.msra.mxu0 0.0
  %387 = vmatprep.subr.mxu0 0.0
  %388 = vmatpush1.msra.mxu0 0.0
  %389 = vmatprep.subr.mxu0 0.0
  %390 = vmatpush1.msra.mxu0 0.0
  %391 = vmatprep.subr.mxu0 0.0
  %392 = vmatpush1.msra.mxu0 0.0
  %393 = vmatprep.subr.mxu0 0.0
  %394 = vmatpush1.msra.mxu0 0.0
  %395 = vmatprep.subr.mxu0 0.0
  %396 = vmatpush1.msra.mxu0 0.0
  %397 = vmatprep.subr.mxu0 0.0
  %398 = vmatpush1.msra.mxu0 0.0
  %399 = vmatprep.subr.mxu0 %v290
  %400 = vmatpush1.msra.mxu0 %v287
  %401 = vmatprep.subr.mxu0 0.0
  %402 = vmatpush2.msra.mxu0 0.0
  %403 = vmatprep.subr.mxu0 0.0
  %404 = vmatpush2.msra.mxu0 0.0
  %405 = vmatprep.subr.mxu0 0.0
  %406 = vmatpush2.msra.mxu0 0.0
  %407 = vmatprep.subr.mxu0 0.0
  %408 = vmatpush2.msra.mxu0 0.0
  %409 = vmatprep.subr.mxu0 0.0
  %410 = vmatpush2.msra.mxu0 0.0
  %411 = vmatprep.subr.mxu0 0.0
  %412 = vmatpush2.msra.mxu0 0.0
  %413 = vmatprep.subr.mxu0 0.0
  %414 = vmatpush2.msra.mxu0 0.0
  %415 = vmatprep.subr.mxu0 0.0
  %416 = vmatpush2.msra.mxu0 0.0
  %417 = vmatprep.subr.mxu0 0.0
  %418 = vmatpush2.msra.mxu0 0.0
  %419 = vmatprep.subr.mxu0 0.0
  %420 = vmatpush2.msra.mxu0 0.0
  %421 = vmatprep.subr.mxu0 0.0
  %422 = vmatpush2.msra.mxu0 0.0
  %423 = vmatprep.subr.mxu0 0.0
  %424 = vmatpush2.msra.mxu0 0.0
  %425 = vmatprep.subr.mxu0 0.0
  %426 = vmatpush2.msra.mxu0 0.0
  %427 = vmatprep.subr.mxu0 0.0
  %428 = vmatpush2.msra.mxu0 0.0
  %429 = vmatprep.subr.mxu0 0.0
  %430 = vmatpush2.msra.mxu0 0.0
  %431 = vmatprep.subr.mxu0 0.0
  %432 = vmatpush2.msra.mxu0 0.0
  %433 = vmatprep.mubr.f32.mxu0 0.0
  %434 = vmatmul.mubr.f32.gmra.mxu0 %v276
  %v435 = vpop.f32.mrf.mxu0
  %v436 = vadd.f32 %v266, %v435
  %v437 = vpop.f32.mrf.mxu0
  %v438 = vadd.f32 %v268, %v437
  %439 = vmatprep.mubr.f32.mxu0 0.0
  %440 = vmatmul.mubr.f32.gmra.mxu0 %v278
  %v441 = vpop.f32.mrf.mxu0
  %v442 = vadd.f32 %v272, %v441
  %v443 = vpop.f32.mrf.mxu0
  %v444 = vadd.f32 %v274, %v443
  %445 = vdwg.mxu0
  %v446 = vld [vmem:[%s0] sm:$0xff]
  %v447 = vld [vmem:[%s0 + $0x8] sm:$0xff]
  %v448 = vld [vmem:[%s0 + $0x10] sm:$0xf]
  %vm449 = vcmp.lt.s32.totalorder %v19, 15
  %vm450 = vcmp.lt.s32.totalorder %v20, 15
  %vm451 = vcmp.lt.s32.totalorder %v21, 15
  %vm452 = vcmp.lt.s32.totalorder %v22, 15
  %vm453 = vmand %vm33, %vm449
  %vm454 = vmand %vm34, %vm450
  %vm455 = vmand %vm35, %vm451
  %vm456 = vmand %vm36, %vm452
  %v457 = vsel %vm453, 1, 0
  %v458 = vsel %vm454, 1, 0
  %v459 = vsel %vm455, 1, 0
  %v460 = vsel %vm456, 1, 0
  %vm461 = vcmp.eq.s32.totalorder %v457, 1
  %vm462 = vcmp.eq.s32.totalorder %v458, 1
  %vm463 = vcmp.eq.s32.totalorder %v459, 1
  %vm464 = vcmp.eq.s32.totalorder %v460, 1
  %v468 = vcombine.high %v446, %v446
  %v469 = vcombine.high %v447, %v447
  %470 = vrot.lane.b32.xlu0 %v446, 126
  %v471 = vpop.permute.xlu0 %470
  %472 = vrot.lane.b32.xlu0 %v468, 126
  %v473 = vpop.permute.xlu0 %472
  %474 = vrot.lane.b32.xlu0 %v447, 126
  %v475 = vpop.permute.xlu0 %474
  %476 = vrot.lane.b32.xlu0 %v469, 126
  %v477 = vpop.permute.xlu0 %476
  %478 = vrot.lane.b32.xlu0 %v448, 126
  %v479 = vpop.permute.xlu0 %478
  %vm480 = vcmask 1031168
  %v481 = vsel %vm480, %v471, %v473
  %v482 = vsel %vm480, %v473, %v475
  %v483 = vsel %vm480, %v475, %v477
  %v484 = vsel %vm480, %v477, %v479
  %v489 = vsel %vm461, %v481, 0.0
  %v490 = vsel %vm462, %v482, 0.0
  %v491 = vsel %vm463, %v483, 0.0
  %v492 = vsel %vm464, %v484, 0.0
  %v493 = vld [vmem:[%s1] sm:$0xff]
  %v494 = vld [vmem:[%s1 + $0x8] sm:$0xff]
  %497 = vrot.lane.b32.xlu0 %v493, 120
  %v498 = vpop.permute.xlu0 %497
  %499 = vrot.lane.b32.xlu0 %v494, 120
  %v500 = vpop.permute.xlu0 %499
  %v501 = vsel %vm104, %v498, 0
  %v503 = vsel %vm104, %v500, 0
  %v506 = vsel %vm109, %v489, 0
  %v509 = vsel %vm109, %v490, 0
  %v512 = vsel %vm109, %v491, 0
  %v515 = vsel %vm109, %v492, 0
  %517 = vmatprep.subr.mxu0 0.0
  %518 = vmatpush1.msra.mxu0 0.0
  %519 = vmatprep.subr.mxu0 0.0
  %520 = vmatpush1.msra.mxu0 0.0
  %521 = vmatprep.subr.mxu0 0.0
  %522 = vmatpush1.msra.mxu0 0.0
  %523 = vmatprep.subr.mxu0 0.0
  %524 = vmatpush1.msra.mxu0 0.0
  %525 = vmatprep.subr.mxu0 0.0
  %526 = vmatpush1.msra.mxu0 0.0
  %527 = vmatprep.subr.mxu0 0.0
  %528 = vmatpush1.msra.mxu0 0.0
  %529 = vmatprep.subr.mxu0 0.0
  %530 = vmatpush1.msra.mxu0 0.0
  %531 = vmatprep.subr.mxu0 0.0
  %532 = vmatpush1.msra.mxu0 0.0
  %533 = vmatprep.subr.mxu0 0.0
  %534 = vmatpush1.msra.mxu0 0.0
  %535 = vmatprep.subr.mxu0 0.0
  %536 = vmatpush1.msra.mxu0 0.0
  %537 = vmatprep.subr.mxu0 0.0
  %538 = vmatpush1.msra.mxu0 0.0
  %539 = vmatprep.subr.mxu0 0.0
  %540 = vmatpush1.msra.mxu0 0.0
  %541 = vmatprep.subr.mxu0 0.0
  %542 = vmatpush1.msra.mxu0 0.0
  %543 = vmatprep.subr.mxu0 0.0
  %544 = vmatpush1.msra.mxu0 0.0
  %545 = vmatprep.subr.mxu0 0.0
  %546 = vmatpush1.msra.mxu0 0.0
  %547 = vmatprep.subr.mxu0 %v509
  %548 = vmatpush1.msra.mxu0 %v506
  %549 = vmatprep.subr.mxu0 0.0
  %550 = vmatpush2.msra.mxu0 0.0
  %551 = vmatprep.subr.mxu0 0.0
  %552 = vmatpush2.msra.mxu0 0.0
  %553 = vmatprep.subr.mxu0 0.0
  %554 = vmatpush2.msra.mxu0 0.0
  %555 = vmatprep.subr.mxu0 0.0
  %556 = vmatpush2.msra.mxu0 0.0
  %557 = vmatprep.subr.mxu0 0.0
  %558 = vmatpush2.msra.mxu0 0.0
  %559 = vmatprep.subr.mxu0 0.0
  %560 = vmatpush2.msra.mxu0 0.0
  %561 = vmatprep.subr.mxu0 0.0
  %562 = vmatpush2.msra.mxu0 0.0
  %563 = vmatprep.subr.mxu0 0.0
  %564 = vmatpush2.msra.mxu0 0.0
  %565 = vmatprep.subr.mxu0 0.0
  %566 = vmatpush2.msra.mxu0 0.0
  %567 = vmatprep.subr.mxu0 0.0
  %568 = vmatpush2.msra.mxu0 0.0
  %569 = vmatprep.subr.mxu0 0.0
  %570 = vmatpush2.msra.mxu0 0.0
  %571 = vmatprep.subr.mxu0 0.0
  %572 = vmatpush2.msra.mxu0 0.0
  %573 = vmatprep.subr.mxu0 0.0
  %574 = vmatpush2.msra.mxu0 0.0
  %575 = vmatprep.subr.mxu0 0.0
  %576 = vmatpush2.msra.mxu0 0.0
  %577 = vmatprep.subr.mxu0 0.0
  %578 = vmatpush2.msra.mxu0 0.0
  %579 = vmatprep.subr.mxu0 0.0
  %580 = vmatpush2.msra.mxu0 0.0
  %581 = vmatprep.mubr.f32.mxu0 0.0
  %582 = vmatmul.mubr.f32.gmra.mxu0 %v501
  %v583 = vpop.f32.mrf.mxu0
  %v584 = vadd.f32 0.0, %v583
  %v585 = vpop.f32.mrf.mxu0
  %v586 = vadd.f32 0.0, %v585
  %587 = vmatprep.mubr.f32.mxu0 0.0
  %588 = vmatmul.mubr.f32.gmra.mxu0 %v503
  %v589 = vpop.f32.mrf.mxu0
  %v590 = vadd.f32 0.0, %v589
  %v591 = vpop.f32.mrf.mxu0
  %v592 = vadd.f32 0.0, %v591
  %593 = vdwg.mxu0
  %594 = vmatprep.subr.mxu0 0.0
  %595 = vmatpush1.msra.mxu0 0.0
  %596 = vmatprep.subr.mxu0 0.0
  %597 = vmatpush1.msra.mxu0 0.0
  %598 = vmatprep.subr.mxu0 0.0
  %599 = vmatpush1.msra.mxu0 0.0
  %600 = vmatprep.subr.mxu0 0.0
  %601 = vmatpush1.msra.mxu0 0.0
  %602 = vmatprep.subr.mxu0 0.0
  %603 = vmatpush1.msra.mxu0 0.0
  %604 = vmatprep.subr.mxu0 0.0
  %605 = vmatpush1.msra.mxu0 0.0
  %606 = vmatprep.subr.mxu0 0.0
  %607 = vmatpush1.msra.mxu0 0.0
  %608 = vmatprep.subr.mxu0 0.0
  %609 = vmatpush1.msra.mxu0 0.0
  %610 = vmatprep.subr.mxu0 0.0
  %611 = vmatpush1.msra.mxu0 0.0
  %612 = vmatprep.subr.mxu0 0.0
  %613 = vmatpush1.msra.mxu0 0.0
  %614 = vmatprep.subr.mxu0 0.0
  %615 = vmatpush1.msra.mxu0 0.0
  %616 = vmatprep.subr.mxu0 0.0
  %617 = vmatpush1.msra.mxu0 0.0
  %618 = vmatprep.subr.mxu0 0.0
  %619 = vmatpush1.msra.mxu0 0.0
  %620 = vmatprep.subr.mxu0 0.0
  %621 = vmatpush1.msra.mxu0 0.0
  %622 = vmatprep.subr.mxu0 0.0
  %623 = vmatpush1.msra.mxu0 0.0
  %624 = vmatprep.subr.mxu0 %v515
  %625 = vmatpush1.msra.mxu0 %v512
  %626 = vmatprep.subr.mxu0 0.0
  %627 = vmatpush2.msra.mxu0 0.0
  %628 = vmatprep.subr.mxu0 0.0
  %629 = vmatpush2.msra.mxu0 0.0
  %630 = vmatprep.subr.mxu0 0.0
  %631 = vmatpush2.msra.mxu0 0.0
  %632 = vmatprep.subr.mxu0 0.0
  %633 = vmatpush2.msra.mxu0 0.0
  %634 = vmatprep.subr.mxu0 0.0
  %635 = vmatpush2.msra.mxu0 0.0
  %636 = vmatprep.subr.mxu0 0.0
  %637 = vmatpush2.msra.mxu0 0.0
  %638 = vmatprep.subr.mxu0 0.0
  %639 = vmatpush2.msra.mxu0 0.0
  %640 = vmatprep.subr.mxu0 0.0
  %641 = vmatpush2.msra.mxu0 0.0
  %642 = vmatprep.subr.mxu0 0.0
  %643 = vmatpush2.msra.mxu0 0.0
  %644 = vmatprep.subr.mxu0 0.0
  %645 = vmatpush2.msra.mxu0 0.0
  %646 = vmatprep.subr.mxu0 0.0
  %647 = vmatpush2.msra.mxu0 0.0
  %648 = vmatprep.subr.mxu0 0.0
  %649 = vmatpush2.msra.mxu0 0.0
  %650 = vmatprep.subr.mxu0 0.0
  %651 = vmatpush2.msra.mxu0 0.0
  %652 = vmatprep.subr.mxu0 0.0
  %653 = vmatpush2.msra.mxu0 0.0
  %654 = vmatprep.subr.mxu0 0.0
  %655 = vmatpush2.msra.mxu0 0.0
  %656 = vmatprep.subr.mxu0 0.0
  %657 = vmatpush2.msra.mxu0 0.0
  %658 = vmatprep.mubr.f32.mxu0 0.0
  %659 = vmatmul.mubr.f32.gmra.mxu0 %v501
  %v660 = vpop.f32.mrf.mxu0
  %v661 = vadd.f32 0.0, %v660
  %v662 = vpop.f32.mrf.mxu0
  %v663 = vadd.f32 0.0, %v662
  %664 = vmatprep.mubr.f32.mxu0 0.0
  %665 = vmatmul.mubr.f32.gmra.mxu0 %v503
  %v666 = vpop.f32.mrf.mxu0
  %v667 = vadd.f32 0.0, %v666
  %v668 = vpop.f32.mrf.mxu0
  %v669 = vadd.f32 0.0, %v668
  %670 = vdwg.mxu0
  %v671 = vadd.f32 %v359, %v584
  %v672 = vadd.f32 %v361, %v586
  %v673 = vadd.f32 %v436, %v661
  %v674 = vadd.f32 %v438, %v663
  %v675 = vadd.f32 %v365, %v590
  %v676 = vadd.f32 %v367, %v592
  %v677 = vadd.f32 %v442, %v667
  %v678 = vadd.f32 %v444, %v669
  %v679 = vld [vmem:[%s0] sm:$0xff]
  %v680 = vld [vmem:[%s0 + $0x8] sm:$0xff]
  %v681 = vld [vmem:[%s0 + $0x10] sm:$0xf]
  %v682 = vsel %vm37, 1, 0
  %v683 = vsel %vm38, 1, 0
  %v684 = vsel %vm39, 1, 0
  %v685 = vsel %vm40, 1, 0
  %vm686 = vcmp.eq.s32.totalorder %v682, 1
  %vm687 = vcmp.eq.s32.totalorder %v683, 1
  %vm688 = vcmp.eq.s32.totalorder %v684, 1
  %vm689 = vcmp.eq.s32.totalorder %v685, 1
  %v693 = vcombine.high %v679, %v679
  %v694 = vcombine.high %v680, %v680
  %695 = vrot.lane.b32.xlu0 %v679, 112
  %v696 = vpop.permute.xlu0 %695
  %697 = vrot.lane.b32.xlu0 %v693, 112
  %v698 = vpop.permute.xlu0 %697
  %699 = vrot.lane.b32.xlu0 %v680, 112
  %v700 = vpop.permute.xlu0 %699
  %701 = vrot.lane.b32.xlu0 %v694, 112
  %v702 = vpop.permute.xlu0 %701
  %703 = vrot.lane.b32.xlu0 %v681, 112
  %v704 = vpop.permute.xlu0 %703
  %vm705 = vcmask 916480
  %v706 = vsel %vm705, %v696, %v698
  %v707 = vsel %vm705, %v698, %v700
  %v708 = vsel %vm705, %v700, %v702
  %v709 = vsel %vm705, %v702, %v704
  %v714 = vsel %vm686, %v706, 0.0
  %v715 = vsel %vm687, %v707, 0.0
  %v716 = vsel %vm688, %v708, 0.0
  %v717 = vsel %vm689, %v709, 0.0
  %v718 = vld [vmem:[%s1] sm:$0xff]
  %v719 = vld [vmem:[%s1 + $0x8] sm:$0xff]
  %722 = vrot.lane.b32.xlu0 %v718, 116
  %v723 = vpop.permute.xlu0 %722
  %724 = vrot.lane.b32.xlu0 %v719, 116
  %v725 = vpop.permute.xlu0 %724
  %v726 = vsel %vm104, %v723, 0
  %v728 = vsel %vm104, %v725, 0
  %v731 = vsel %vm109, %v714, 0
  %v734 = vsel %vm109, %v715, 0
  %v737 = vsel %vm109, %v716, 0
  %v740 = vsel %vm109, %v717, 0
  %742 = vmatprep.subr.mxu0 0.0
  %743 = vmatpush1.msra.mxu0 0.0
  %744 = vmatprep.subr.mxu0 0.0
  %745 = vmatpush1.msra.mxu0 0.0
  %746 = vmatprep.subr.mxu0 0.0
  %747 = vmatpush1.msra.mxu0 0.0
  %748 = vmatprep.subr.mxu0 0.0
  %749 = vmatpush1.msra.mxu0 0.0
  %750 = vmatprep.subr.mxu0 0.0
  %751 = vmatpush1.msra.mxu0 0.0
  %752 = vmatprep.subr.mxu0 0.0
  %753 = vmatpush1.msra.mxu0 0.0
  %754 = vmatprep.subr.mxu0 0.0
  %755 = vmatpush1.msra.mxu0 0.0
  %756 = vmatprep.subr.mxu0 0.0
  %757 = vmatpush1.msra.mxu0 0.0
  %758 = vmatprep.subr.mxu0 0.0
  %759 = vmatpush1.msra.mxu0 0.0
  %760 = vmatprep.subr.mxu0 0.0
  %761 = vmatpush1.msra.mxu0 0.0
  %762 = vmatprep.subr.mxu0 0.0
  %763 = vmatpush1.msra.mxu0 0.0
  %764 = vmatprep.subr.mxu0 0.0
  %765 = vmatpush1.msra.mxu0 0.0
  %766 = vmatprep.subr.mxu0 0.0
  %767 = vmatpush1.msra.mxu0 0.0
  %768 = vmatprep.subr.mxu0 0.0
  %769 = vmatpush1.msra.mxu0 0.0
  %770 = vmatprep.subr.mxu0 0.0
  %771 = vmatpush1.msra.mxu0 0.0
  %772 = vmatprep.subr.mxu0 %v734
  %773 = vmatpush1.msra.mxu0 %v731
  %774 = vmatprep.subr.mxu0 0.0
  %775 = vmatpush2.msra.mxu0 0.0
  %776 = vmatprep.subr.mxu0 0.0
  %777 = vmatpush2.msra.mxu0 0.0
  %778 = vmatprep.subr.mxu0 0.0
  %779 = vmatpush2.msra.mxu0 0.0
  %780 = vmatprep.subr.mxu0 0.0
  %781 = vmatpush2.msra.mxu0 0.0
  %782 = vmatprep.subr.mxu0 0.0
  %783 = vmatpush2.msra.mxu0 0.0
  %784 = vmatprep.subr.mxu0 0.0
  %785 = vmatpush2.msra.mxu0 0.0
  %786 = vmatprep.subr.mxu0 0.0
  %787 = vmatpush2.msra.mxu0 0.0
  %788 = vmatprep.subr.mxu0 0.0
  %789 = vmatpush2.msra.mxu0 0.0
  %790 = vmatprep.subr.mxu0 0.0
  %791 = vmatpush2.msra.mxu0 0.0
  %792 = vmatprep.subr.mxu0 0.0
  %793 = vmatpush2.msra.mxu0 0.0
  %794 = vmatprep.subr.mxu0 0.0
  %795 = vmatpush2.msra.mxu0 0.0
  %796 = vmatprep.subr.mxu0 0.0
  %797 = vmatpush2.msra.mxu0 0.0
  %798 = vmatprep.subr.mxu0 0.0
  %799 = vmatpush2.msra.mxu0 0.0
  %800 = vmatprep.subr.mxu0 0.0
  %801 = vmatpush2.msra.mxu0 0.0
  %802 = vmatprep.subr.mxu0 0.0
  %803 = vmatpush2.msra.mxu0 0.0
  %804 = vmatprep.subr.mxu0 0.0
  %805 = vmatpush2.msra.mxu0 0.0
  %806 = vmatprep.mubr.f32.mxu0 0.0
  %807 = vmatmul.mubr.f32.gmra.mxu0 %v726
  %v808 = vpop.f32.mrf.mxu0
  %v809 = vadd.f32 0.0, %v808
  %v810 = vpop.f32.mrf.mxu0
  %v811 = vadd.f32 0.0, %v810
  %812 = vmatprep.mubr.f32.mxu0 0.0
  %813 = vmatmul.mubr.f32.gmra.mxu0 %v728
  %v814 = vpop.f32.mrf.mxu0
  %v815 = vadd.f32 0.0, %v814
  %v816 = vpop.f32.mrf.mxu0
  %v817 = vadd.f32 0.0, %v816
  %818 = vdwg.mxu0
  %819 = vmatprep.subr.mxu0 0.0
  %820 = vmatpush1.msra.mxu0 0.0
  %821 = vmatprep.subr.mxu0 0.0
  %822 = vmatpush1.msra.mxu0 0.0
  %823 = vmatprep.subr.mxu0 0.0
  %824 = vmatpush1.msra.mxu0 0.0
  %825 = vmatprep.subr.mxu0 0.0
  %826 = vmatpush1.msra.mxu0 0.0
  %827 = vmatprep.subr.mxu0 0.0
  %828 = vmatpush1.msra.mxu0 0.0
  %829 = vmatprep.subr.mxu0 0.0
  %830 = vmatpush1.msra.mxu0 0.0
  %831 = vmatprep.subr.mxu0 0.0
  %832 = vmatpush1.msra.mxu0 0.0
  %833 = vmatprep.subr.mxu0 0.0
  %834 = vmatpush1.msra.mxu0 0.0
  %835 = vmatprep.subr.mxu0 0.0
  %836 = vmatpush1.msra.mxu0 0.0
  %837 = vmatprep.subr.mxu0 0.0
  %838 = vmatpush1.msra.mxu0 0.0
  %839 = vmatprep.subr.mxu0 0.0
  %840 = vmatpush1.msra.mxu0 0.0
  %841 = vmatprep.subr.mxu0 0.0
  %842 = vmatpush1.msra.mxu0 0.0
  %843 = vmatprep.subr.mxu0 0.0
  %844 = vmatpush1.msra.mxu0 0.0
  %845 = vmatprep.subr.mxu0 0.0
  %846 = vmatpush1.msra.mxu0 0.0
  %847 = vmatprep.subr.mxu0 0.0
  %848 = vmatpush1.msra.mxu0 0.0
  %849 = vmatprep.subr.mxu0 %v740
  %850 = vmatpush1.msra.mxu0 %v737
  %851 = vmatprep.subr.mxu0 0.0
  %852 = vmatpush2.msra.mxu0 0.0
  %853 = vmatprep.subr.mxu0 0.0
  %854 = vmatpush2.msra.mxu0 0.0
  %855 = vmatprep.subr.mxu0 0.0
  %856 = vmatpush2.msra.mxu0 0.0
  %857 = vmatprep.subr.mxu0 0.0
  %858 = vmatpush2.msra.mxu0 0.0
  %859 = vmatprep.subr.mxu0 0.0
  %860 = vmatpush2.msra.mxu0 0.0
  %861 = vmatprep.subr.mxu0 0.0
  %862 = vmatpush2.msra.mxu0 0.0
  %863 = vmatprep.subr.mxu0 0.0
  %864 = vmatpush2.msra.mxu0 0.0
  %865 = vmatprep.subr.mxu0 0.0
  %866 = vmatpush2.msra.mxu0 0.0
  %867 = vmatprep.subr.mxu0 0.0
  %868 = vmatpush2.msra.mxu0 0.0
  %869 = vmatprep.subr.mxu0 0.0
  %870 = vmatpush2.msra.mxu0 0.0
  %871 = vmatprep.subr.mxu0 0.0
  %872 = vmatpush2.msra.mxu0 0.0
  %873 = vmatprep.subr.mxu0 0.0
  %874 = vmatpush2.msra.mxu0 0.0
  %875 = vmatprep.subr.mxu0 0.0
  %876 = vmatpush2.msra.mxu0 0.0
  %877 = vmatprep.subr.mxu0 0.0
  %878 = vmatpush2.msra.mxu0 0.0
  %879 = vmatprep.subr.mxu0 0.0
  %880 = vmatpush2.msra.mxu0 0.0
  %881 = vmatprep.subr.mxu0 0.0
  %882 = vmatpush2.msra.mxu0 0.0
  %883 = vmatprep.mubr.f32.mxu0 0.0
  %884 = vmatmul.mubr.f32.gmra.mxu0 %v726
  %v885 = vpop.f32.mrf.mxu0
  %v886 = vadd.f32 0.0, %v885
  %v887 = vpop.f32.mrf.mxu0
  %v888 = vadd.f32 0.0, %v887
  %889 = vmatprep.mubr.f32.mxu0 0.0
  %890 = vmatmul.mubr.f32.gmra.mxu0 %v728
  %v891 = vpop.f32.mrf.mxu0
  %v892 = vadd.f32 0.0, %v891
  %v893 = vpop.f32.mrf.mxu0
  %v894 = vadd.f32 0.0, %v893
  %895 = vdwg.mxu0
  %v896 = vadd.f32 %v671, %v809
  %v897 = vadd.f32 %v672, %v811
  %v898 = vadd.f32 %v673, %v886
  %v899 = vadd.f32 %v674, %v888
  %v900 = vadd.f32 %v675, %v815
  %v901 = vadd.f32 %v676, %v817
  %v902 = vadd.f32 %v677, %v892
  %v903 = vadd.f32 %v678, %v894
  %v904 = vld [vmem:[%s0] sm:$0xff]
  %v905 = vld [vmem:[%s0 + $0x8] sm:$0xff]
  %v906 = vld [vmem:[%s0 + $0x10] sm:$0xf]
  %907 = vrot.lane.b32.xlu0 %v718, 112
  %v908 = vpop.permute.xlu0 %907
  %909 = vrot.lane.b32.xlu0 %v719, 112
  %v910 = vpop.permute.xlu0 %909
  %v914 = vcombine.high %v904, %v904
  %v915 = vcombine.high %v905, %v905
  %916 = vrot.lane.b32.xlu0 %v904, 111
  %v917 = vpop.permute.xlu0 %916
  %918 = vrot.lane.b32.xlu0 %v914, 111
  %v919 = vpop.permute.xlu0 %918
  %920 = vrot.lane.b32.xlu0 %v905, 111
  %v921 = vpop.permute.xlu0 %920
  %922 = vrot.lane.b32.xlu0 %v915, 111
  %v923 = vpop.permute.xlu0 %922
  %924 = vrot.lane.b32.xlu0 %v906, 111
  %v925 = vpop.permute.xlu0 %924
  %vm926 = vcmask 908288
  %v927 = vsel %vm926, %v917, %v919
  %v928 = vsel %vm926, %v919, %v921
  %v929 = vsel %vm926, %v921, %v923
  %v930 = vsel %vm926, %v923, %v925
  %v931 = vsel %vm104, %v908, 0
  %v933 = vsel %vm104, %v910, 0
  %v935 = vsel %vm109, %v927, 0
  %v937 = vsel %vm109, %v928, 0
  %v939 = vsel %vm109, %v929, 0
  %v941 = vsel %vm109, %v930, 0
  %943 = vmatprep.subr.mxu0 0.0
  %944 = vmatpush1.msra.mxu0 0.0
  %945 = vmatprep.subr.mxu0 0.0
  %946 = vmatpush1.msra.mxu0 0.0
  %947 = vmatprep.subr.mxu0 0.0
  %948 = vmatpush1.msra.mxu0 0.0
  %949 = vmatprep.subr.mxu0 0.0
  %950 = vmatpush1.msra.mxu0 0.0
  %951 = vmatprep.subr.mxu0 0.0
  %952 = vmatpush1.msra.mxu0 0.0
  %953 = vmatprep.subr.mxu0 0.0
  %954 = vmatpush1.msra.mxu0 0.0
  %955 = vmatprep.subr.mxu0 0.0
  %956 = vmatpush1.msra.mxu0 0.0
  %957 = vmatprep.subr.mxu0 0.0
  %958 = vmatpush1.msra.mxu0 0.0
  %959 = vmatprep.subr.mxu0 0.0
  %960 = vmatpush1.msra.mxu0 0.0
  %961 = vmatprep.subr.mxu0 0.0
  %962 = vmatpush1.msra.mxu0 0.0
  %963 = vmatprep.subr.mxu0 0.0
  %964 = vmatpush1.msra.mxu0 0.0
  %965 = vmatprep.subr.mxu0 0.0
  %966 = vmatpush1.msra.mxu0 0.0
  %967 = vmatprep.subr.mxu0 0.0
  %968 = vmatpush1.msra.mxu0 0.0
  %969 = vmatprep.subr.mxu0 0.0
  %970 = vmatpush1.msra.mxu0 0.0
  %971 = vmatprep.subr.mxu0 0.0
  %972 = vmatpush1.msra.mxu0 0.0
  %973 = vmatprep.subr.mxu0 %v937
  %974 = vmatpush1.msra.mxu0 %v935
  %975 = vmatprep.subr.mxu0 0.0
  %976 = vmatpush2.msra.mxu0 0.0
  %977 = vmatprep.subr.mxu0 0.0
  %978 = vmatpush2.msra.mxu0 0.0
  %979 = vmatprep.subr.mxu0 0.0
  %980 = vmatpush2.msra.mxu0 0.0
  %981 = vmatprep.subr.mxu0 0.0
  %982 = vmatpush2.msra.mxu0 0.0
  %983 = vmatprep.subr.mxu0 0.0
  %984 = vmatpush2.msra.mxu0 0.0
  %985 = vmatprep.subr.mxu0 0.0
  %986 = vmatpush2.msra.mxu0 0.0
  %987 = vmatprep.subr.mxu0 0.0
  %988 = vmatpush2.msra.mxu0 0.0
  %989 = vmatprep.subr.mxu0 0.0
  %990 = vmatpush2.msra.mxu0 0.0
  %991 = vmatprep.subr.mxu0 0.0
  %992 = vmatpush2.msra.mxu0 0.0
  %993 = vmatprep.subr.mxu0 0.0
  %994 = vmatpush2.msra.mxu0 0.0
  %995 = vmatprep.subr.mxu0 0.0
  %996 = vmatpush2.msra.mxu0 0.0
  %997 = vmatprep.subr.mxu0 0.0
  %998 = vmatpush2.msra.mxu0 0.0
  %999 = vmatprep.subr.mxu0 0.0
  %1000 = vmatpush2.msra.mxu0 0.0
  %1001 = vmatprep.subr.mxu0 0.0
  %1002 = vmatpush2.msra.mxu0 0.0
  %1003 = vmatprep.subr.mxu0 0.0
  %1004 = vmatpush2.msra.mxu0 0.0
  %1005 = vmatprep.subr.mxu0 0.0
  %1006 = vmatpush2.msra.mxu0 0.0
  %1007 = vmatprep.mubr.f32.mxu0 0.0
  %1008 = vmatmul.mubr.f32.gmra.mxu0 %v931
  %v1009 = vpop.f32.mrf.mxu0
  %v1010 = vadd.f32 0.0, %v1009
  %v1011 = vpop.f32.mrf.mxu0
  %v1012 = vadd.f32 0.0, %v1011
  %1013 = vmatprep.mubr.f32.mxu0 0.0
  %1014 = vmatmul.mubr.f32.gmra.mxu0 %v933
  %v1015 = vpop.f32.mrf.mxu0
  %v1016 = vadd.f32 0.0, %v1015
  %v1017 = vpop.f32.mrf.mxu0
  %v1018 = vadd.f32 0.0, %v1017
  %1019 = vdwg.mxu0
  %1020 = vmatprep.subr.mxu0 0.0
  %1021 = vmatpush1.msra.mxu0 0.0
  %1022 = vmatprep.subr.mxu0 0.0
  %1023 = vmatpush1.msra.mxu0 0.0
  %1024 = vmatprep.subr.mxu0 0.0
  %1025 = vmatpush1.msra.mxu0 0.0
  %1026 = vmatprep.subr.mxu0 0.0
  %1027 = vmatpush1.msra.mxu0 0.0
  %1028 = vmatprep.subr.mxu0 0.0
  %1029 = vmatpush1.msra.mxu0 0.0
  %1030 = vmatprep.subr.mxu0 0.0
  %1031 = vmatpush1.msra.mxu0 0.0
  %1032 = vmatprep.subr.mxu0 0.0
  %1033 = vmatpush1.msra.mxu0 0.0
  %1034 = vmatprep.subr.mxu0 0.0
  %1035 = vmatpush1.msra.mxu0 0.0
  %1036 = vmatprep.subr.mxu0 0.0
  %1037 = vmatpush1.msra.mxu0 0.0
  %1038 = vmatprep.subr.mxu0 0.0
  %1039 = vmatpush1.msra.mxu0 0.0
  %1040 = vmatprep.subr.mxu0 0.0
  %1041 = vmatpush1.msra.mxu0 0.0
  %1042 = vmatprep.subr.mxu0 0.0
  %1043 = vmatpush1.msra.mxu0 0.0
  %1044 = vmatprep.subr.mxu0 0.0
  %1045 = vmatpush1.msra.mxu0 0.0
  %1046 = vmatprep.subr.mxu0 0.0
  %1047 = vmatpush1.msra.mxu0 0.0
  %1048 = vmatprep.subr.mxu0 0.0
  %1049 = vmatpush1.msra.mxu0 0.0
  %1050 = vmatprep.subr.mxu0 %v941
  %1051 = vmatpush1.msra.mxu0 %v939
  %1052 = vmatprep.subr.mxu0 0.0
  %1053 = vmatpush2.msra.mxu0 0.0
  %1054 = vmatprep.subr.mxu0 0.0
  %1055 = vmatpush2.msra.mxu0 0.0
  %1056 = vmatprep.subr.mxu0 0.0
  %1057 = vmatpush2.msra.mxu0 0.0
  %1058 = vmatprep.subr.mxu0 0.0
  %1059 = vmatpush2.msra.mxu0 0.0
  %1060 = vmatprep.subr.mxu0 0.0
  %1061 = vmatpush2.msra.mxu0 0.0
  %1062 = vmatprep.subr.mxu0 0.0
  %1063 = vmatpush2.msra.mxu0 0.0
  %1064 = vmatprep.subr.mxu0 0.0
  %1065 = vmatpush2.msra.mxu0 0.0
  %1066 = vmatprep.subr.mxu0 0.0
  %1067 = vmatpush2.msra.mxu0 0.0
  %1068 = vmatprep.subr.mxu0 0.0
  %1069 = vmatpush2.msra.mxu0 0.0
  %1070 = vmatprep.subr.mxu0 0.0
  %1071 = vmatpush2.msra.mxu0 0.0
  %1072 = vmatprep.subr.mxu0 0.0
  %1073 = vmatpush2.msra.mxu0 0.0
  %1074 = vmatprep.subr.mxu0 0.0
  %1075 = vmatpush2.msra.mxu0 0.0
  %1076 = vmatprep.subr.mxu0 0.0
  %1077 = vmatpush2.msra.mxu0 0.0
  %1078 = vmatprep.subr.mxu0 0.0
  %1079 = vmatpush2.msra.mxu0 0.0
  %1080 = vmatprep.subr.mxu0 0.0
  %1081 = vmatpush2.msra.mxu0 0.0
  %1082 = vmatprep.subr.mxu0 0.0
  %1083 = vmatpush2.msra.mxu0 0.0
  %1084 = vmatprep.mubr.f32.mxu0 0.0
  %1085 = vmatmul.mubr.f32.gmra.mxu0 %v931
  %v1086 = vpop.f32.mrf.mxu0
  %v1087 = vadd.f32 0.0, %v1086
  %v1088 = vpop.f32.mrf.mxu0
  %v1089 = vadd.f32 0.0, %v1088
  %1090 = vmatprep.mubr.f32.mxu0 0.0
  %1091 = vmatmul.mubr.f32.gmra.mxu0 %v933
  %v1092 = vpop.f32.mrf.mxu0
  %v1093 = vadd.f32 0.0, %v1092
  %v1094 = vpop.f32.mrf.mxu0
  %v1095 = vadd.f32 0.0, %v1094
  %1096 = vdwg.mxu0
  %v1097 = vadd.f32 %v896, %v1010
  %v1098 = vadd.f32 %v897, %v1012
  %v1099 = vadd.f32 %v898, %v1087
  %v1100 = vadd.f32 %v899, %v1089
  %v1101 = vadd.f32 %v900, %v1016
  %v1102 = vadd.f32 %v901, %v1018
  %v1103 = vadd.f32 %v902, %v1093
  %v1104 = vadd.f32 %v903, %v1095
  %v1105 = vld [vmem:[%s0] sm:$0xff]
  %v1106 = vld [vmem:[%s0 + $0x8] sm:$0xff]
  %v1107 = vld [vmem:[%s0 + $0x10] sm:$0xf]
  %v1108 = vsel %vm449, 1, 0
  %v1109 = vsel %vm450, 1, 0
  %v1110 = vsel %vm451, 1, 0
  %v1111 = vsel %vm452, 1, 0
  %vm1112 = vcmp.eq.s32.totalorder %v1108, 1
  %vm1113 = vcmp.eq.s32.totalorder %v1109, 1
  %vm1114 = vcmp.eq.s32.totalorder %v1110, 1
  %vm1115 = vcmp.eq.s32.totalorder %v1111, 1
  %v1119 = vcombine.high %v1105, %v1105
  %v1120 = vcombine.high %v1106, %v1106
  %1121 = vrot.lane.b32.xlu0 %v1105, 110
  %v1122 = vpop.permute.xlu0 %1121
  %1123 = vrot.lane.b32.xlu0 %v1119, 110
  %v1124 = vpop.permute.xlu0 %1123
  %1125 = vrot.lane.b32.xlu0 %v1106, 110
  %v1126 = vpop.permute.xlu0 %1125
  %1127 = vrot.lane.b32.xlu0 %v1120, 110
  %v1128 = vpop.permute.xlu0 %1127
  %1129 = vrot.lane.b32.xlu0 %v1107, 110
  %v1130 = vpop.permute.xlu0 %1129
  %vm1131 = vcmask 900096
  %v1132 = vsel %vm1131, %v1122, %v1124
  %v1133 = vsel %vm1131, %v1124, %v1126
  %v1134 = vsel %vm1131, %v1126, %v1128
  %v1135 = vsel %vm1131, %v1128, %v1130
  %v1140 = vsel %vm1112, %v1132, 0.0
  %v1141 = vsel %vm1113, %v1133, 0.0
  %v1142 = vsel %vm1114, %v1134, 0.0
  %v1143 = vsel %vm1115, %v1135, 0.0
  %v1144 = vld [vmem:[%s1] sm:$0xff]
  %v1145 = vld [vmem:[%s1 + $0x8] sm:$0xff]
  %1148 = vrot.lane.b32.xlu0 %v1144, 108
  %v1149 = vpop.permute.xlu0 %1148
  %1150 = vrot.lane.b32.xlu0 %v1145, 108
  %v1151 = vpop.permute.xlu0 %1150
  %v1152 = vsel %vm104, %v1149, 0
  %v1154 = vsel %vm104, %v1151, 0
  %v1157 = vsel %vm109, %v1140, 0
  %v1160 = vsel %vm109, %v1141, 0
  %v1163 = vsel %vm109, %v1142, 0
  %v1166 = vsel %vm109, %v1143, 0
  %1168 = vmatprep.subr.mxu0 0.0
  %1169 = vmatpush1.msra.mxu0 0.0
  %1170 = vmatprep.subr.mxu0 0.0
  %1171 = vmatpush1.msra.mxu0 0.0
  %1172 = vmatprep.subr.mxu0 0.0
  %1173 = vmatpush1.msra.mxu0 0.0
  %1174 = vmatprep.subr.mxu0 0.0
  %1175 = vmatpush1.msra.mxu0 0.0
  %1176 = vmatprep.subr.mxu0 0.0
  %1177 = vmatpush1.msra.mxu0 0.0
  %1178 = vmatprep.subr.mxu0 0.0
  %1179 = vmatpush1.msra.mxu0 0.0
  %1180 = vmatprep.subr.mxu0 0.0
  %1181 = vmatpush1.msra.mxu0 0.0
  %1182 = vmatprep.subr.mxu0 0.0
  %1183 = vmatpush1.msra.mxu0 0.0
  %1184 = vmatprep.subr.mxu0 0.0
  %1185 = vmatpush1.msra.mxu0 0.0
  %1186 = vmatprep.subr.mxu0 0.0
  %1187 = vmatpush1.msra.mxu0 0.0
  %1188 = vmatprep.subr.mxu0 0.0
  %1189 = vmatpush1.msra.mxu0 0.0
  %1190 = vmatprep.subr.mxu0 0.0
  %1191 = vmatpush1.msra.mxu0 0.0
  %1192 = vmatprep.subr.mxu0 0.0
  %1193 = vmatpush1.msra.mxu0 0.0
  %1194 = vmatprep.subr.mxu0 0.0
  %1195 = vmatpush1.msra.mxu0 0.0
  %1196 = vmatprep.subr.mxu0 0.0
  %1197 = vmatpush1.msra.mxu0 0.0
  %1198 = vmatprep.subr.mxu0 %v1160
  %1199 = vmatpush1.msra.mxu0 %v1157
  %1200 = vmatprep.subr.mxu0 0.0
  %1201 = vmatpush2.msra.mxu0 0.0
  %1202 = vmatprep.subr.mxu0 0.0
  %1203 = vmatpush2.msra.mxu0 0.0
  %1204 = vmatprep.subr.mxu0 0.0
  %1205 = vmatpush2.msra.mxu0 0.0
  %1206 = vmatprep.subr.mxu0 0.0
  %1207 = vmatpush2.msra.mxu0 0.0
  %1208 = vmatprep.subr.mxu0 0.0
  %1209 = vmatpush2.msra.mxu0 0.0
  %1210 = vmatprep.subr.mxu0 0.0
  %1211 = vmatpush2.msra.mxu0 0.0
  %1212 = vmatprep.subr.mxu0 0.0
  %1213 = vmatpush2.msra.mxu0 0.0
  %1214 = vmatprep.subr.mxu0 0.0
  %1215 = vmatpush2.msra.mxu0 0.0
  %1216 = vmatprep.subr.mxu0 0.0
  %1217 = vmatpush2.msra.mxu0 0.0
  %1218 = vmatprep.subr.mxu0 0.0
  %1219 = vmatpush2.msra.mxu0 0.0
  %1220 = vmatprep.subr.mxu0 0.0
  %1221 = vmatpush2.msra.mxu0 0.0
  %1222 = vmatprep.subr.mxu0 0.0
  %1223 = vmatpush2.msra.mxu0 0.0
  %1224 = vmatprep.subr.mxu0 0.0
  %1225 = vmatpush2.msra.mxu0 0.0
  %1226 = vmatprep.subr.mxu0 0.0
  %1227 = vmatpush2.msra.mxu0 0.0
  %1228 = vmatprep.subr.mxu0 0.0
  %1229 = vmatpush2.msra.mxu0 0.0
  %1230 = vmatprep.subr.mxu0 0.0
  %1231 = vmatpush2.msra.mxu0 0.0
  %1232 = vmatprep.mubr.f32.mxu0 0.0
  %1233 = vmatmul.mubr.f32.gmra.mxu0 %v1152
  %v1234 = vpop.f32.mrf.mxu0
  %v1235 = vadd.f32 0.0, %v1234
  %v1236 = vpop.f32.mrf.mxu0
  %v1237 = vadd.f32 0.0, %v1236
  %1238 = vmatprep.mubr.f32.mxu0 0.0
  %1239 = vmatmul.mubr.f32.gmra.mxu0 %v1154
  %v1240 = vpop.f32.mrf.mxu0
  %v1241 = vadd.f32 0.0, %v1240
  %v1242 = vpop.f32.mrf.mxu0
  %v1243 = vadd.f32 0.0, %v1242
  %1244 = vdwg.mxu0
  %1245 = vmatprep.subr.mxu0 0.0
  %1246 = vmatpush1.msra.mxu0 0.0
  %1247 = vmatprep.subr.mxu0 0.0
  %1248 = vmatpush1.msra.mxu0 0.0
  %1249 = vmatprep.subr.mxu0 0.0
  %1250 = vmatpush1.msra.mxu0 0.0
  %1251 = vmatprep.subr.mxu0 0.0
  %1252 = vmatpush1.msra.mxu0 0.0
  %1253 = vmatprep.subr.mxu0 0.0
  %1254 = vmatpush1.msra.mxu0 0.0
  %1255 = vmatprep.subr.mxu0 0.0
  %1256 = vmatpush1.msra.mxu0 0.0
  %1257 = vmatprep.subr.mxu0 0.0
  %1258 = vmatpush1.msra.mxu0 0.0
  %1259 = vmatprep.subr.mxu0 0.0
  %1260 = vmatpush1.msra.mxu0 0.0
  %1261 = vmatprep.subr.mxu0 0.0
  %1262 = vmatpush1.msra.mxu0 0.0
  %1263 = vmatprep.subr.mxu0 0.0
  %1264 = vmatpush1.msra.mxu0 0.0
  %1265 = vmatprep.subr.mxu0 0.0
  %1266 = vmatpush1.msra.mxu0 0.0
  %1267 = vmatprep.subr.mxu0 0.0
  %1268 = vmatpush1.msra.mxu0 0.0
  %1269 = vmatprep.subr.mxu0 0.0
  %1270 = vmatpush1.msra.mxu0 0.0
  %1271 = vmatprep.subr.mxu0 0.0
  %1272 = vmatpush1.msra.mxu0 0.0
  %1273 = vmatprep.subr.mxu0 0.0
  %1274 = vmatpush1.msra.mxu0 0.0
  %1275 = vmatprep.subr.mxu0 %v1166
  %1276 = vmatpush1.msra.mxu0 %v1163
  %1277 = vmatprep.subr.mxu0 0.0
  %1278 = vmatpush2.msra.mxu0 0.0
  %1279 = vmatprep.subr.mxu0 0.0
  %1280 = vmatpush2.msra.mxu0 0.0
  %1281 = vmatprep.subr.mxu0 0.0
  %1282 = vmatpush2.msra.mxu0 0.0
  %1283 = vmatprep.subr.mxu0 0.0
  %1284 = vmatpush2.msra.mxu0 0.0
  %1285 = vmatprep.subr.mxu0 0.0
  %1286 = vmatpush2.msra.mxu0 0.0
  %1287 = vmatprep.subr.mxu0 0.0
  %1288 = vmatpush2.msra.mxu0 0.0
  %1289 = vmatprep.subr.mxu0 0.0
  %1290 = vmatpush2.msra.mxu0 0.0
  %1291 = vmatprep.subr.mxu0 0.0
  %1292 = vmatpush2.msra.mxu0 0.0
  %1293 = vmatprep.subr.mxu0 0.0
  %1294 = vmatpush2.msra.mxu0 0.0
  %1295 = vmatprep.subr.mxu0 0.0
  %1296 = vmatpush2.msra.mxu0 0.0
  %1297 = vmatprep.subr.mxu0 0.0
  %1298 = vmatpush2.msra.mxu0 0.0
  %1299 = vmatprep.subr.mxu0 0.0
  %1300 = vmatpush2.msra.mxu0 0.0
  %1301 = vmatprep.subr.mxu0 0.0
  %1302 = vmatpush2.msra.mxu0 0.0
  %1303 = vmatprep.subr.mxu0 0.0
  %1304 = vmatpush2.msra.mxu0 0.0
  %1305 = vmatprep.subr.mxu0 0.0
  %1306 = vmatpush2.msra.mxu0 0.0
  %1307 = vmatprep.subr.mxu0 0.0
  %1308 = vmatpush2.msra.mxu0 0.0
  %1309 = vmatprep.mubr.f32.mxu0 0.0
  %1310 = vmatmul.mubr.f32.gmra.mxu0 %v1152
  %v1311 = vpop.f32.mrf.mxu0
  %v1312 = vadd.f32 0.0, %v1311
  %v1313 = vpop.f32.mrf.mxu0
  %v1314 = vadd.f32 0.0, %v1313
  %1315 = vmatprep.mubr.f32.mxu0 0.0
  %1316 = vmatmul.mubr.f32.gmra.mxu0 %v1154
  %v1317 = vpop.f32.mrf.mxu0
  %v1318 = vadd.f32 0.0, %v1317
  %v1319 = vpop.f32.mrf.mxu0
  %v1320 = vadd.f32 0.0, %v1319
  %1321 = vdwg.mxu0
  %v1322 = vadd.f32 %v1097, %v1235
  %v1323 = vadd.f32 %v1098, %v1237
  %v1324 = vadd.f32 %v1099, %v1312
  %v1325 = vadd.f32 %v1100, %v1314
  %v1326 = vadd.f32 %v1101, %v1241
  %v1327 = vadd.f32 %v1102, %v1243
  %v1328 = vadd.f32 %v1103, %v1318
  %v1329 = vadd.f32 %v1104, %v1320
  %v1330 = vld [vmem:[%s0] sm:$0xff]
  %v1331 = vld [vmem:[%s0 + $0x8] sm:$0xff]
  %v1332 = vld [vmem:[%s0 + $0x10] sm:$0xf]
  %vm1333 = vcmp.lt.s32.totalorder %v27, 15
  %vm1334 = vcmp.lt.s32.totalorder %v28, 15
  %vm1335 = vcmp.lt.s32.totalorder %v29, 15
  %vm1336 = vcmp.lt.s32.totalorder %v30, 15
  %vm1337 = vmand %vm1333, %vm37
  %vm1338 = vmand %vm1334, %vm38
  %vm1339 = vmand %vm1335, %vm39
  %vm1340 = vmand %vm1336, %vm40
  %v1341 = vsel %vm1337, 1, 0
  %v1342 = vsel %vm1338, 1, 0
  %v1343 = vsel %vm1339, 1, 0
  %v1344 = vsel %vm1340, 1, 0
  %vm1345 = vcmp.eq.s32.totalorder %v1341, 1
  %vm1346 = vcmp.eq.s32.totalorder %v1342, 1
  %vm1347 = vcmp.eq.s32.totalorder %v1343, 1
  %vm1348 = vcmp.eq.s32.totalorder %v1344, 1
  %v1352 = vcombine.high %v1330, %v1330
  %v1353 = vcombine.high %v1331, %v1331
  %1354 = vrot.lane.b32.xlu0 %v1330, 96
  %v1355 = vpop.permute.xlu0 %1354
  %1356 = vrot.lane.b32.xlu0 %v1352, 96
  %v1357 = vpop.permute.xlu0 %1356
  %1358 = vrot.lane.b32.xlu0 %v1331, 96
  %v1359 = vpop.permute.xlu0 %1358
  %1360 = vrot.lane.b32.xlu0 %v1353, 96
  %v1361 = vpop.permute.xlu0 %1360
  %1362 = vrot.lane.b32.xlu0 %v1332, 96
  %v1363 = vpop.permute.xlu0 %1362
  %vm1364 = vcmask 785408
  %v1365 = vsel %vm1364, %v1355, %v1357
  %v1366 = vsel %vm1364, %v1357, %v1359
  %v1367 = vsel %vm1364, %v1359, %v1361
  %v1368 = vsel %vm1364, %v1361, %v1363
  %v1373 = vsel %vm1345, %v1365, 0.0
  %v1374 = vsel %vm1346, %v1366, 0.0
  %v1375 = vsel %vm1347, %v1367, 0.0
  %v1376 = vsel %vm1348, %v1368, 0.0
  %v1377 = vld [vmem:[%s1] sm:$0xff]
  %v1378 = vld [vmem:[%s1 + $0x8] sm:$0xff]
  %1381 = vrot.lane.b32.xlu0 %v1377, 104
  %v1382 = vpop.permute.xlu0 %1381
  %1383 = vrot.lane.b32.xlu0 %v1378, 104
  %v1384 = vpop.permute.xlu0 %1383
  %v1385 = vsel %vm104, %v1382, 0
  %v1387 = vsel %vm104, %v1384, 0
  %v1390 = vsel %vm109, %v1373, 0
  %v1393 = vsel %vm109, %v1374, 0
  %v1396 = vsel %vm109, %v1375, 0
  %v1399 = vsel %vm109, %v1376, 0
  %1401 = vmatprep.subr.mxu0 0.0
  %1402 = vmatpush1.msra.mxu0 0.0
  %1403 = vmatprep.subr.mxu0 0.0
  %1404 = vmatpush1.msra.mxu0 0.0
  %1405 = vmatprep.subr.mxu0 0.0
  %1406 = vmatpush1.msra.mxu0 0.0
  %1407 = vmatprep.subr.mxu0 0.0
  %1408 = vmatpush1.msra.mxu0 0.0
  %1409 = vmatprep.subr.mxu0 0.0
  %1410 = vmatpush1.msra.mxu0 0.0
  %1411 = vmatprep.subr.mxu0 0.0
  %1412 = vmatpush1.msra.mxu0 0.0
  %1413 = vmatprep.subr.mxu0 0.0
  %1414 = vmatpush1.msra.mxu0 0.0
  %1415 = vmatprep.subr.mxu0 0.0
  %1416 = vmatpush1.msra.mxu0 0.0
  %1417 = vmatprep.subr.mxu0 0.0
  %1418 = vmatpush1.msra.mxu0 0.0
  %1419 = vmatprep.subr.mxu0 0.0
  %1420 = vmatpush1.msra.mxu0 0.0
  %1421 = vmatprep.subr.mxu0 0.0
  %1422 = vmatpush1.msra.mxu0 0.0
  %1423 = vmatprep.subr.mxu0 0.0
  %1424 = vmatpush1.msra.mxu0 0.0
  %1425 = vmatprep.subr.mxu0 0.0
  %1426 = vmatpush1.msra.mxu0 0.0
  %1427 = vmatprep.subr.mxu0 0.0
  %1428 = vmatpush1.msra.mxu0 0.0
  %1429 = vmatprep.subr.mxu0 0.0
  %1430 = vmatpush1.msra.mxu0 0.0
  %1431 = vmatprep.subr.mxu0 %v1393
  %1432 = vmatpush1.msra.mxu0 %v1390
  %1433 = vmatprep.subr.mxu0 0.0
  %1434 = vmatpush2.msra.mxu0 0.0
  %1435 = vmatprep.subr.mxu0 0.0
  %1436 = vmatpush2.msra.mxu0 0.0
  %1437 = vmatprep.subr.mxu0 0.0
  %1438 = vmatpush2.msra.mxu0 0.0
  %1439 = vmatprep.subr.mxu0 0.0
  %1440 = vmatpush2.msra.mxu0 0.0
  %1441 = vmatprep.subr.mxu0 0.0
  %1442 = vmatpush2.msra.mxu0 0.0
  %1443 = vmatprep.subr.mxu0 0.0
  %1444 = vmatpush2.msra.mxu0 0.0
  %1445 = vmatprep.subr.mxu0 0.0
  %1446 = vmatpush2.msra.mxu0 0.0
  %1447 = vmatprep.subr.mxu0 0.0
  %1448 = vmatpush2.msra.mxu0 0.0
  %1449 = vmatprep.subr.mxu0 0.0
  %1450 = vmatpush2.msra.mxu0 0.0
  %1451 = vmatprep.subr.mxu0 0.0
  %1452 = vmatpush2.msra.mxu0 0.0
  %1453 = vmatprep.subr.mxu0 0.0
  %1454 = vmatpush2.msra.mxu0 0.0
  %1455 = vmatprep.subr.mxu0 0.0
  %1456 = vmatpush2.msra.mxu0 0.0
  %1457 = vmatprep.subr.mxu0 0.0
  %1458 = vmatpush2.msra.mxu0 0.0
  %1459 = vmatprep.subr.mxu0 0.0
  %1460 = vmatpush2.msra.mxu0 0.0
  %1461 = vmatprep.subr.mxu0 0.0
  %1462 = vmatpush2.msra.mxu0 0.0
  %1463 = vmatprep.subr.mxu0 0.0
  %1464 = vmatpush2.msra.mxu0 0.0
  %1465 = vmatprep.mubr.f32.mxu0 0.0
  %1466 = vmatmul.mubr.f32.gmra.mxu0 %v1385
  %v1467 = vpop.f32.mrf.mxu0
  %v1468 = vadd.f32 0.0, %v1467
  %v1469 = vpop.f32.mrf.mxu0
  %v1470 = vadd.f32 0.0, %v1469
  %1471 = vmatprep.mubr.f32.mxu0 0.0
  %1472 = vmatmul.mubr.f32.gmra.mxu0 %v1387
  %v1473 = vpop.f32.mrf.mxu0
  %v1474 = vadd.f32 0.0, %v1473
  %v1475 = vpop.f32.mrf.mxu0
  %v1476 = vadd.f32 0.0, %v1475
  %1477 = vdwg.mxu0
  %1478 = vmatprep.subr.mxu0 0.0
  %1479 = vmatpush1.msra.mxu0 0.0
  %1480 = vmatprep.subr.mxu0 0.0
  %1481 = vmatpush1.msra.mxu0 0.0
  %1482 = vmatprep.subr.mxu0 0.0
  %1483 = vmatpush1.msra.mxu0 0.0
  %1484 = vmatprep.subr.mxu0 0.0
  %1485 = vmatpush1.msra.mxu0 0.0
  %1486 = vmatprep.subr.mxu0 0.0
  %1487 = vmatpush1.msra.mxu0 0.0
  %1488 = vmatprep.subr.mxu0 0.0
  %1489 = vmatpush1.msra.mxu0 0.0
  %1490 = vmatprep.subr.mxu0 0.0
  %1491 = vmatpush1.msra.mxu0 0.0
  %1492 = vmatprep.subr.mxu0 0.0
  %1493 = vmatpush1.msra.mxu0 0.0
  %1494 = vmatprep.subr.mxu0 0.0
  %1495 = vmatpush1.msra.mxu0 0.0
  %1496 = vmatprep.subr.mxu0 0.0
  %1497 = vmatpush1.msra.mxu0 0.0
  %1498 = vmatprep.subr.mxu0 0.0
  %1499 = vmatpush1.msra.mxu0 0.0
  %1500 = vmatprep.subr.mxu0 0.0
  %1501 = vmatpush1.msra.mxu0 0.0
  %1502 = vmatprep.subr.mxu0 0.0
  %1503 = vmatpush1.msra.mxu0 0.0
  %1504 = vmatprep.subr.mxu0 0.0
  %1505 = vmatpush1.msra.mxu0 0.0
  %1506 = vmatprep.subr.mxu0 0.0
  %1507 = vmatpush1.msra.mxu0 0.0
  %1508 = vmatprep.subr.mxu0 %v1399
  %1509 = vmatpush1.msra.mxu0 %v1396
  %1510 = vmatprep.subr.mxu0 0.0
  %1511 = vmatpush2.msra.mxu0 0.0
  %1512 = vmatprep.subr.mxu0 0.0
  %1513 = vmatpush2.msra.mxu0 0.0
  %1514 = vmatprep.subr.mxu0 0.0
  %1515 = vmatpush2.msra.mxu0 0.0
  %1516 = vmatprep.subr.mxu0 0.0
  %1517 = vmatpush2.msra.mxu0 0.0
  %1518 = vmatprep.subr.mxu0 0.0
  %1519 = vmatpush2.msra.mxu0 0.0
  %1520 = vmatprep.subr.mxu0 0.0
  %1521 = vmatpush2.msra.mxu0 0.0
  %1522 = vmatprep.subr.mxu0 0.0
  %1523 = vmatpush2.msra.mxu0 0.0
  %1524 = vmatprep.subr.mxu0 0.0
  %1525 = vmatpush2.msra.mxu0 0.0
  %1526 = vmatprep.subr.mxu0 0.0
  %1527 = vmatpush2.msra.mxu0 0.0
  %1528 = vmatprep.subr.mxu0 0.0
  %1529 = vmatpush2.msra.mxu0 0.0
  %1530 = vmatprep.subr.mxu0 0.0
  %1531 = vmatpush2.msra.mxu0 0.0
  %1532 = vmatprep.subr.mxu0 0.0
  %1533 = vmatpush2.msra.mxu0 0.0
  %1534 = vmatprep.subr.mxu0 0.0
  %1535 = vmatpush2.msra.mxu0 0.0
  %1536 = vmatprep.subr.mxu0 0.0
  %1537 = vmatpush2.msra.mxu0 0.0
  %1538 = vmatprep.subr.mxu0 0.0
  %1539 = vmatpush2.msra.mxu0 0.0
  %1540 = vmatprep.subr.mxu0 0.0
  %1541 = vmatpush2.msra.mxu0 0.0
  %1542 = vmatprep.mubr.f32.mxu0 0.0
  %1543 = vmatmul.mubr.f32.gmra.mxu0 %v1385
  %v1544 = vpop.f32.mrf.mxu0
  %v1545 = vadd.f32 0.0, %v1544
  %v1546 = vpop.f32.mrf.mxu0
  %v1547 = vadd.f32 0.0, %v1546
  %1548 = vmatprep.mubr.f32.mxu0 0.0
  %1549 = vmatmul.mubr.f32.gmra.mxu0 %v1387
  %v1550 = vpop.f32.mrf.mxu0
  %v1551 = vadd.f32 0.0, %v1550
  %v1552 = vpop.f32.mrf.mxu0
  %v1553 = vadd.f32 0.0, %v1552
  %1554 = vdwg.mxu0
  %v1555 = vadd.f32 %v1322, %v1468
  %v1556 = vadd.f32 %v1323, %v1470
  %v1557 = vadd.f32 %v1324, %v1545
  %v1558 = vadd.f32 %v1325, %v1547
  %v1559 = vadd.f32 %v1326, %v1474
  %v1560 = vadd.f32 %v1327, %v1476
  %v1561 = vadd.f32 %v1328, %v1551
  %v1562 = vadd.f32 %v1329, %v1553
  %v1563 = vld [vmem:[%s0] sm:$0xff]
  %v1564 = vld [vmem:[%s0 + $0x8] sm:$0xff]
  %v1565 = vld [vmem:[%s0 + $0x10] sm:$0xf]
  %v1566 = vsel %vm1333, 1, 0
  %v1567 = vsel %vm1334, 1, 0
  %v1568 = vsel %vm1335, 1, 0
  %v1569 = vsel %vm1336, 1, 0
  %vm1570 = vcmp.eq.s32.totalorder %v1566, 1
  %vm1571 = vcmp.eq.s32.totalorder %v1567, 1
  %vm1572 = vcmp.eq.s32.totalorder %v1568, 1
  %vm1573 = vcmp.eq.s32.totalorder %v1569, 1
  %v1577 = vcombine.high %v1563, %v1563
  %v1578 = vcombine.high %v1564, %v1564
  %1579 = vrot.lane.b32.xlu0 %v1563, 95
  %v1580 = vpop.permute.xlu0 %1579
  %1581 = vrot.lane.b32.xlu0 %v1577, 95
  %v1582 = vpop.permute.xlu0 %1581
  %1583 = vrot.lane.b32.xlu0 %v1564, 95
  %v1584 = vpop.permute.xlu0 %1583
  %1585 = vrot.lane.b32.xlu0 %v1578, 95
  %v1586 = vpop.permute.xlu0 %1585
  %1587 = vrot.lane.b32.xlu0 %v1565, 95
  %v1588 = vpop.permute.xlu0 %1587
  %vm1589 = vcmask 777216
  %v1590 = vsel %vm1589, %v1580, %v1582
  %v1591 = vsel %vm1589, %v1582, %v1584
  %v1592 = vsel %vm1589, %v1584, %v1586
  %v1593 = vsel %vm1589, %v1586, %v1588
  %v1598 = vsel %vm1570, %v1590, 0.0
  %v1599 = vsel %vm1571, %v1591, 0.0
  %v1600 = vsel %vm1572, %v1592, 0.0
  %v1601 = vsel %vm1573, %v1593, 0.0
  %v1602 = vld [vmem:[%s1] sm:$0xff]
  %v1603 = vld [vmem:[%s1 + $0x8] sm:$0xff]
  %1606 = vrot.lane.b32.xlu0 %v1602, 100
  %v1607 = vpop.permute.xlu0 %1606
  %1608 = vrot.lane.b32.xlu0 %v1603, 100
  %v1609 = vpop.permute.xlu0 %1608
  %v1610 = vsel %vm104, %v1607, 0
  %v1612 = vsel %vm104, %v1609, 0
  %v1615 = vsel %vm109, %v1598, 0
  %v1618 = vsel %vm109, %v1599, 0
  %v1621 = vsel %vm109, %v1600, 0
  %v1624 = vsel %vm109, %v1601, 0
  %1626 = vmatprep.subr.mxu0 0.0
  %1627 = vmatpush1.msra.mxu0 0.0
  %1628 = vmatprep.subr.mxu0 0.0
  %1629 = vmatpush1.msra.mxu0 0.0
  %1630 = vmatprep.subr.mxu0 0.0
  %1631 = vmatpush1.msra.mxu0 0.0
  %1632 = vmatprep.subr.mxu0 0.0
  %1633 = vmatpush1.msra.mxu0 0.0
  %1634 = vmatprep.subr.mxu0 0.0
  %1635 = vmatpush1.msra.mxu0 0.0
  %1636 = vmatprep.subr.mxu0 0.0
  %1637 = vmatpush1.msra.mxu0 0.0
  %1638 = vmatprep.subr.mxu0 0.0
  %1639 = vmatpush1.msra.mxu0 0.0
  %1640 = vmatprep.subr.mxu0 0.0
  %1641 = vmatpush1.msra.mxu0 0.0
  %1642 = vmatprep.subr.mxu0 0.0
  %1643 = vmatpush1.msra.mxu0 0.0
  %1644 = vmatprep.subr.mxu0 0.0
  %1645 = vmatpush1.msra.mxu0 0.0
  %1646 = vmatprep.subr.mxu0 0.0
  %1647 = vmatpush1.msra.mxu0 0.0
  %1648 = vmatprep.subr.mxu0 0.0
  %1649 = vmatpush1.msra.mxu0 0.0
  %1650 = vmatprep.subr.mxu0 0.0
  %1651 = vmatpush1.msra.mxu0 0.0
  %1652 = vmatprep.subr.mxu0 0.0
  %1653 = vmatpush1.msra.mxu0 0.0
  %1654 = vmatprep.subr.mxu0 0.0
  %1655 = vmatpush1.msra.mxu0 0.0
  %1656 = vmatprep.subr.mxu0 %v1618
  %1657 = vmatpush1.msra.mxu0 %v1615
  %1658 = vmatprep.subr.mxu0 0.0
  %1659 = vmatpush2.msra.mxu0 0.0
  %1660 = vmatprep.subr.mxu0 0.0
  %1661 = vmatpush2.msra.mxu0 0.0
  %1662 = vmatprep.subr.mxu0 0.0
  %1663 = vmatpush2.msra.mxu0 0.0
  %1664 = vmatprep.subr.mxu0 0.0
  %1665 = vmatpush2.msra.mxu0 0.0
  %1666 = vmatprep.subr.mxu0 0.0
  %1667 = vmatpush2.msra.mxu0 0.0
  %1668 = vmatprep.subr.mxu0 0.0
  %1669 = vmatpush2.msra.mxu0 0.0
  %1670 = vmatprep.subr.mxu0 0.0
  %1671 = vmatpush2.msra.mxu0 0.0
  %1672 = vmatprep.subr.mxu0 0.0
  %1673 = vmatpush2.msra.mxu0 0.0
  %1674 = vmatprep.subr.mxu0 0.0
  %1675 = vmatpush2.msra.mxu0 0.0
  %1676 = vmatprep.subr.mxu0 0.0
  %1677 = vmatpush2.msra.mxu0 0.0
  %1678 = vmatprep.subr.mxu0 0.0
  %1679 = vmatpush2.msra.mxu0 0.0
  %1680 = vmatprep.subr.mxu0 0.0
  %1681 = vmatpush2.msra.mxu0 0.0
  %1682 = vmatprep.subr.mxu0 0.0
  %1683 = vmatpush2.msra.mxu0 0.0
  %1684 = vmatprep.subr.mxu0 0.0
  %1685 = vmatpush2.msra.mxu0 0.0
  %1686 = vmatprep.subr.mxu0 0.0
  %1687 = vmatpush2.msra.mxu0 0.0
  %1688 = vmatprep.subr.mxu0 0.0
  %1689 = vmatpush2.msra.mxu0 0.0
  %1690 = vmatprep.mubr.f32.mxu0 0.0
  %1691 = vmatmul.mubr.f32.gmra.mxu0 %v1610
  %v1692 = vpop.f32.mrf.mxu0
  %v1693 = vadd.f32 0.0, %v1692
  %v1694 = vpop.f32.mrf.mxu0
  %v1695 = vadd.f32 0.0, %v1694
  %1696 = vmatprep.mubr.f32.mxu0 0.0
  %1697 = vmatmul.mubr.f32.gmra.mxu0 %v1612
  %v1698 = vpop.f32.mrf.mxu0
  %v1699 = vadd.f32 0.0, %v1698
  %v1700 = vpop.f32.mrf.mxu0
  %v1701 = vadd.f32 0.0, %v1700
  %1702 = vdwg.mxu0
  %1703 = vmatprep.subr.mxu0 0.0
  %1704 = vmatpush1.msra.mxu0 0.0
  %1705 = vmatprep.subr.mxu0 0.0
  %1706 = vmatpush1.msra.mxu0 0.0
  %1707 = vmatprep.subr.mxu0 0.0
  %1708 = vmatpush1.msra.mxu0 0.0
  %1709 = vmatprep.subr.mxu0 0.0
  %1710 = vmatpush1.msra.mxu0 0.0
  %1711 = vmatprep.subr.mxu0 0.0
  %1712 = vmatpush1.msra.mxu0 0.0
  %1713 = vmatprep.subr.mxu0 0.0
  %1714 = vmatpush1.msra.mxu0 0.0
  %1715 = vmatprep.subr.mxu0 0.0
  %1716 = vmatpush1.msra.mxu0 0.0
  %1717 = vmatprep.subr.mxu0 0.0
  %1718 = vmatpush1.msra.mxu0 0.0
  %1719 = vmatprep.subr.mxu0 0.0
  %1720 = vmatpush1.msra.mxu0 0.0
  %1721 = vmatprep.subr.mxu0 0.0
  %1722 = vmatpush1.msra.mxu0 0.0
  %1723 = vmatprep.subr.mxu0 0.0
  %1724 = vmatpush1.msra.mxu0 0.0
  %1725 = vmatprep.subr.mxu0 0.0
  %1726 = vmatpush1.msra.mxu0 0.0
  %1727 = vmatprep.subr.mxu0 0.0
  %1728 = vmatpush1.msra.mxu0 0.0
  %1729 = vmatprep.subr.mxu0 0.0
  %1730 = vmatpush1.msra.mxu0 0.0
  %1731 = vmatprep.subr.mxu0 0.0
  %1732 = vmatpush1.msra.mxu0 0.0
  %1733 = vmatprep.subr.mxu0 %v1624
  %1734 = vmatpush1.msra.mxu0 %v1621
  %1735 = vmatprep.subr.mxu0 0.0
  %1736 = vmatpush2.msra.mxu0 0.0
  %1737 = vmatprep.subr.mxu0 0.0
  %1738 = vmatpush2.msra.mxu0 0.0
  %1739 = vmatprep.subr.mxu0 0.0
  %1740 = vmatpush2.msra.mxu0 0.0
  %1741 = vmatprep.subr.mxu0 0.0
  %1742 = vmatpush2.msra.mxu0 0.0
  %1743 = vmatprep.subr.mxu0 0.0
  %1744 = vmatpush2.msra.mxu0 0.0
  %1745 = vmatprep.subr.mxu0 0.0
  %1746 = vmatpush2.msra.mxu0 0.0
  %1747 = vmatprep.subr.mxu0 0.0
  %1748 = vmatpush2.msra.mxu0 0.0
  %1749 = vmatprep.subr.mxu0 0.0
  %1750 = vmatpush2.msra.mxu0 0.0
  %1751 = vmatprep.subr.mxu0 0.0
  %1752 = vmatpush2.msra.mxu0 0.0
  %1753 = vmatprep.subr.mxu0 0.0
  %1754 = vmatpush2.msra.mxu0 0.0
  %1755 = vmatprep.subr.mxu0 0.0
  %1756 = vmatpush2.msra.mxu0 0.0
  %1757 = vmatprep.subr.mxu0 0.0
  %1758 = vmatpush2.msra.mxu0 0.0
  %1759 = vmatprep.subr.mxu0 0.0
  %1760 = vmatpush2.msra.mxu0 0.0
  %1761 = vmatprep.subr.mxu0 0.0
  %1762 = vmatpush2.msra.mxu0 0.0
  %1763 = vmatprep.subr.mxu0 0.0
  %1764 = vmatpush2.msra.mxu0 0.0
  %1765 = vmatprep.subr.mxu0 0.0
  %1766 = vmatpush2.msra.mxu0 0.0
  %1767 = vmatprep.mubr.f32.mxu0 0.0
  %1768 = vmatmul.mubr.f32.gmra.mxu0 %v1610
  %v1769 = vpop.f32.mrf.mxu0
  %v1770 = vadd.f32 0.0, %v1769
  %v1771 = vpop.f32.mrf.mxu0
  %v1772 = vadd.f32 0.0, %v1771
  %1773 = vmatprep.mubr.f32.mxu0 0.0
  %1774 = vmatmul.mubr.f32.gmra.mxu0 %v1612
  %v1775 = vpop.f32.mrf.mxu0
  %v1776 = vadd.f32 0.0, %v1775
  %v1777 = vpop.f32.mrf.mxu0
  %v1778 = vadd.f32 0.0, %v1777
  %1779 = vdwg.mxu0
  %v1780 = vadd.f32 %v1555, %v1693
  %v1781 = vadd.f32 %v1556, %v1695
  %v1782 = vadd.f32 %v1557, %v1770
  %v1783 = vadd.f32 %v1558, %v1772
  %v1784 = vadd.f32 %v1559, %v1699
  %v1785 = vadd.f32 %v1560, %v1701
  %v1786 = vadd.f32 %v1561, %v1776
  %v1787 = vadd.f32 %v1562, %v1778
  %v1788 = vld [vmem:[%s0] sm:$0xff]
  %v1789 = vld [vmem:[%s0 + $0x8] sm:$0xff]
  %v1790 = vld [vmem:[%s0 + $0x10] sm:$0xf]
  %vm1791 = vmand %vm1333, %vm449
  %vm1792 = vmand %vm1334, %vm450
  %vm1793 = vmand %vm1335, %vm451
  %vm1794 = vmand %vm1336, %vm452
  %v1795 = vsel %vm1791, 1, 0
  %v1796 = vsel %vm1792, 1, 0
  %v1797 = vsel %vm1793, 1, 0
  %v1798 = vsel %vm1794, 1, 0
  %vm1799 = vcmp.eq.s32.totalorder %v1795, 1
  %vm1800 = vcmp.eq.s32.totalorder %v1796, 1
  %vm1801 = vcmp.eq.s32.totalorder %v1797, 1
  %vm1802 = vcmp.eq.s32.totalorder %v1798, 1
  %v1806 = vcombine.high %v1788, %v1788
  %v1807 = vcombine.high %v1789, %v1789
  %1808 = vrot.lane.b32.xlu0 %v1788, 94
  %v1809 = vpop.permute.xlu0 %1808
  %1810 = vrot.lane.b32.xlu0 %v1806, 94
  %v1811 = vpop.permute.xlu0 %1810
  %1812 = vrot.lane.b32.xlu0 %v1789, 94
  %v1813 = vpop.permute.xlu0 %1812
  %1814 = vrot.lane.b32.xlu0 %v1807, 94
  %v1815 = vpop.permute.xlu0 %1814
  %1816 = vrot.lane.b32.xlu0 %v1790, 94
  %v1817 = vpop.permute.xlu0 %1816
  %vm1818 = vcmask 769024
  %v1819 = vsel %vm1818, %v1809, %v1811
  %v1820 = vsel %vm1818, %v1811, %v1813
  %v1821 = vsel %vm1818, %v1813, %v1815
  %v1822 = vsel %vm1818, %v1815, %v1817
  %v1827 = vsel %vm1799, %v1819, 0.0
  %v1828 = vsel %vm1800, %v1820, 0.0
  %v1829 = vsel %vm1801, %v1821, 0.0
  %v1830 = vsel %vm1802, %v1822, 0.0
  %v1831 = vld [vmem:[%s1] sm:$0xff]
  %v1832 = vld [vmem:[%s1 + $0x8] sm:$0xff]
  %1835 = vrot.lane.b32.xlu0 %v1831, 96
  %v1836 = vpop.permute.xlu0 %1835
  %1837 = vrot.lane.b32.xlu0 %v1832, 96
  %v1838 = vpop.permute.xlu0 %1837
  %v1839 = vsel %vm104, %v1836, 0
  %v1841 = vsel %vm104, %v1838, 0
  %v1844 = vsel %vm109, %v1827, 0
  %v1847 = vsel %vm109, %v1828, 0
  %v1850 = vsel %vm109, %v1829, 0
  %v1853 = vsel %vm109, %v1830, 0
  %1855 = vmatprep.subr.mxu0 0.0
  %1856 = vmatpush1.msra.mxu0 0.0
  %1857 = vmatprep.subr.mxu0 0.0
  %1858 = vmatpush1.msra.mxu0 0.0
  %1859 = vmatprep.subr.mxu0 0.0
  %1860 = vmatpush1.msra.mxu0 0.0
  %1861 = vmatprep.subr.mxu0 0.0
  %1862 = vmatpush1.msra.mxu0 0.0
  %1863 = vmatprep.subr.mxu0 0.0
  %1864 = vmatpush1.msra.mxu0 0.0
  %1865 = vmatprep.subr.mxu0 0.0
  %1866 = vmatpush1.msra.mxu0 0.0
  %1867 = vmatprep.subr.mxu0 0.0
  %1868 = vmatpush1.msra.mxu0 0.0
  %1869 = vmatprep.subr.mxu0 0.0
  %1870 = vmatpush1.msra.mxu0 0.0
  %1871 = vmatprep.subr.mxu0 0.0
  %1872 = vmatpush1.msra.mxu0 0.0
  %1873 = vmatprep.subr.mxu0 0.0
  %1874 = vmatpush1.msra.mxu0 0.0
  %1875 = vmatprep.subr.mxu0 0.0
  %1876 = vmatpush1.msra.mxu0 0.0
  %1877 = vmatprep.subr.mxu0 0.0
  %1878 = vmatpush1.msra.mxu0 0.0
  %1879 = vmatprep.subr.mxu0 0.0
  %1880 = vmatpush1.msra.mxu0 0.0
  %1881 = vmatprep.subr.mxu0 0.0
  %1882 = vmatpush1.msra.mxu0 0.0
  %1883 = vmatprep.subr.mxu0 0.0
  %1884 = vmatpush1.msra.mxu0 0.0
  %1885 = vmatprep.subr.mxu0 %v1847
  %1886 = vmatpush1.msra.mxu0 %v1844
  %1887 = vmatprep.subr.mxu0 0.0
  %1888 = vmatpush2.msra.mxu0 0.0
  %1889 = vmatprep.subr.mxu0 0.0
  %1890 = vmatpush2.msra.mxu0 0.0
  %1891 = vmatprep.subr.mxu0 0.0
  %1892 = vmatpush2.msra.mxu0 0.0
  %1893 = vmatprep.subr.mxu0 0.0
  %1894 = vmatpush2.msra.mxu0 0.0
  %1895 = vmatprep.subr.mxu0 0.0
  %1896 = vmatpush2.msra.mxu0 0.0
  %1897 = vmatprep.subr.mxu0 0.0
  %1898 = vmatpush2.msra.mxu0 0.0
  %1899 = vmatprep.subr.mxu0 0.0
  %1900 = vmatpush2.msra.mxu0 0.0
  %1901 = vmatprep.subr.mxu0 0.0
  %1902 = vmatpush2.msra.mxu0 0.0
  %1903 = vmatprep.subr.mxu0 0.0
  %1904 = vmatpush2.msra.mxu0 0.0
  %1905 = vmatprep.subr.mxu0 0.0
  %1906 = vmatpush2.msra.mxu0 0.0
  %1907 = vmatprep.subr.mxu0 0.0
  %1908 = vmatpush2.msra.mxu0 0.0
  %1909 = vmatprep.subr.mxu0 0.0
  %1910 = vmatpush2.msra.mxu0 0.0
  %1911 = vmatprep.subr.mxu0 0.0
  %1912 = vmatpush2.msra.mxu0 0.0
  %1913 = vmatprep.subr.mxu0 0.0
  %1914 = vmatpush2.msra.mxu0 0.0
  %1915 = vmatprep.subr.mxu0 0.0
  %1916 = vmatpush2.msra.mxu0 0.0
  %1917 = vmatprep.subr.mxu0 0.0
  %1918 = vmatpush2.msra.mxu0 0.0
  %1919 = vmatprep.mubr.f32.mxu0 0.0
  %1920 = vmatmul.mubr.f32.gmra.mxu0 %v1839
  %v1921 = vpop.f32.mrf.mxu0
  %v1922 = vadd.f32 0.0, %v1921
  %v1923 = vpop.f32.mrf.mxu0
  %v1924 = vadd.f32 0.0, %v1923
  %1925 = vmatprep.mubr.f32.mxu0 0.0
  %1926 = vmatmul.mubr.f32.gmra.mxu0 %v1841
  %v1927 = vpop.f32.mrf.mxu0
  %v1928 = vadd.f32 0.0, %v1927
  %v1929 = vpop.f32.mrf.mxu0
  %v1930 = vadd.f32 0.0, %v1929
  %1931 = vdwg.mxu0
  %1932 = vmatprep.subr.mxu0 0.0
  %1933 = vmatpush1.msra.mxu0 0.0
  %1934 = vmatprep.subr.mxu0 0.0
  %1935 = vmatpush1.msra.mxu0 0.0
  %1936 = vmatprep.subr.mxu0 0.0
  %1937 = vmatpush1.msra.mxu0 0.0
  %1938 = vmatprep.subr.mxu0 0.0
  %1939 = vmatpush1.msra.mxu0 0.0
  %1940 = vmatprep.subr.mxu0 0.0
  %1941 = vmatpush1.msra.mxu0 0.0
  %1942 = vmatprep.subr.mxu0 0.0
  %1943 = vmatpush1.msra.mxu0 0.0
  %1944 = vmatprep.subr.mxu0 0.0
  %1945 = vmatpush1.msra.mxu0 0.0
  %1946 = vmatprep.subr.mxu0 0.0
  %1947 = vmatpush1.msra.mxu0 0.0
  %1948 = vmatprep.subr.mxu0 0.0
  %1949 = vmatpush1.msra.mxu0 0.0
  %1950 = vmatprep.subr.mxu0 0.0
  %1951 = vmatpush1.msra.mxu0 0.0
  %1952 = vmatprep.subr.mxu0 0.0
  %1953 = vmatpush1.msra.mxu0 0.0
  %1954 = vmatprep.subr.mxu0 0.0
  %1955 = vmatpush1.msra.mxu0 0.0
  %1956 = vmatprep.subr.mxu0 0.0
  %1957 = vmatpush1.msra.mxu0 0.0
  %1958 = vmatprep.subr.mxu0 0.0
  %1959 = vmatpush1.msra.mxu0 0.0
  %1960 = vmatprep.subr.mxu0 0.0
  %1961 = vmatpush1.msra.mxu0 0.0
  %1962 = vmatprep.subr.mxu0 %v1853
  %1963 = vmatpush1.msra.mxu0 %v1850
  %1964 = vmatprep.subr.mxu0 0.0
  %1965 = vmatpush2.msra.mxu0 0.0
  %1966 = vmatprep.subr.mxu0 0.0
  %1967 = vmatpush2.msra.mxu0 0.0
  %1968 = vmatprep.subr.mxu0 0.0
  %1969 = vmatpush2.msra.mxu0 0.0
  %1970 = vmatprep.subr.mxu0 0.0
  %1971 = vmatpush2.msra.mxu0 0.0
  %1972 = vmatprep.subr.mxu0 0.0
  %1973 = vmatpush2.msra.mxu0 0.0
  %1974 = vmatprep.subr.mxu0 0.0
  %1975 = vmatpush2.msra.mxu0 0.0
  %1976 = vmatprep.subr.mxu0 0.0
  %1977 = vmatpush2.msra.mxu0 0.0
  %1978 = vmatprep.subr.mxu0 0.0
  %1979 = vmatpush2.msra.mxu0 0.0
  %1980 = vmatprep.subr.mxu0 0.0
  %1981 = vmatpush2.msra.mxu0 0.0
  %1982 = vmatprep.subr.mxu0 0.0
  %1983 = vmatpush2.msra.mxu0 0.0
  %1984 = vmatprep.subr.mxu0 0.0
  %1985 = vmatpush2.msra.mxu0 0.0
  %1986 = vmatprep.subr.mxu0 0.0
  %1987 = vmatpush2.msra.mxu0 0.0
  %1988 = vmatprep.subr.mxu0 0.0
  %1989 = vmatpush2.msra.mxu0 0.0
  %1990 = vmatprep.subr.mxu0 0.0
  %1991 = vmatpush2.msra.mxu0 0.0
  %1992 = vmatprep.subr.mxu0 0.0
  %1993 = vmatpush2.msra.mxu0 0.0
  %1994 = vmatprep.subr.mxu0 0.0
  %1995 = vmatpush2.msra.mxu0 0.0
  %1996 = vmatprep.mubr.f32.mxu0 0.0
  %1997 = vmatmul.mubr.f32.gmra.mxu0 %v1839
  %v1998 = vpop.f32.mrf.mxu0
  %v1999 = vadd.f32 0.0, %v1998
  %v2000 = vpop.f32.mrf.mxu0
  %v2001 = vadd.f32 0.0, %v2000
  %2002 = vmatprep.mubr.f32.mxu0 0.0
  %2003 = vmatmul.mubr.f32.gmra.mxu0 %v1841
  %v2004 = vpop.f32.mrf.mxu0
  %v2005 = vadd.f32 0.0, %v2004
  %v2006 = vpop.f32.mrf.mxu0
  %v2007 = vadd.f32 0.0, %v2006
  %2008 = vdwg.mxu0
  %v2009 = vadd.f32 %v1780, %v1922
  %v2010 = vadd.f32 %v1781, %v1924
  %v2011 = vadd.f32 %v1782, %v1999
  %v2012 = vadd.f32 %v1783, %v2001
  %v2013 = vadd.f32 %v1784, %v1928
  %v2014 = vadd.f32 %v1785, %v1930
  %v2015 = vadd.f32 %v1786, %v2005
  %v2016 = vadd.f32 %v1787, %v2007
  %v2017 = vld [vmem:[%s2] sm:$0xff]
  %2019 = vset.pattern.permute.xlu0 2
  %2020 = vperm.xlu0 %2019, %v2017
  %v2021 = vpop.permute.xlu0 %2020
  %v2023 = vadd.f32 %v2013, %v2021
  %v2024 = vadd.f32 %v2014, %v2021
  %v2025 = vadd.f32 %v2015, %v2021
  %v2026 = vadd.f32 %v2016, %v2021
  %v2027 = vadd.f32 %v2009, %v2010
  %v2028 = vadd.f32 %v2027, %v2011
  %v2029 = vadd.f32 %v2028, %v2012
  %2030 = vadd.xlane.f32.xlu0 %v2029
  %v2031 = vpop.xlane.xlu0 %2030
  %v2032 = vmul.f32 %v2031, 0.001953125
  %v2033 = vsub.f32 %v2009, %v2032
  %v2034 = vsub.f32 %v2010, %v2032
  %v2035 = vsub.f32 %v2011, %v2032
  %v2036 = vsub.f32 %v2012, %v2032
  %v2037 = vmul.f32 %v2033, %v2033
  %v2038 = vmul.f32 %v2034, %v2034
  %v2039 = vmul.f32 %v2035, %v2035
  %v2040 = vmul.f32 %v2036, %v2036
  %v2041 = vadd.f32 %v2037, %v2038
  %v2042 = vadd.f32 %v2041, %v2039
  %v2043 = vadd.f32 %v2042, %v2040
  %2044 = vadd.xlane.f32.xlu0 %v2043
  %v2045 = vpop.xlane.xlu0 %2044
  %v2046 = vmul.f32 %v2045, 0.001953125
  %v2047 = vadd.f32 %v2046, 1e-05
  %v2048 = vrsqrt.pop %v2047
  %v2049 = vmul.f32 %v2017, %v2048
  %2051 = vset.pattern.permute.xlu0 0
  %2052 = vperm.xlu0 %2051, %v2049
  %v2053 = vpop.permute.xlu0 %2052
  %v2055 = vmul.f32 %v2033, %v2053
  %v2056 = vmul.f32 %v2034, %v2053
  %v2057 = vmul.f32 %v2035, %v2053
  %v2058 = vmul.f32 %v2036, %v2053
  %2059 = vset.pattern.permute.xlu0 1
  %2060 = vperm.xlu0 %2059, %v2017
  %v2061 = vpop.permute.xlu0 %2060
  %v2063 = vadd.f32 %v2055, %v2061
  %v2064 = vadd.f32 %v2056, %v2061
  %v2065 = vadd.f32 %v2057, %v2061
  %v2066 = vadd.f32 %v2058, %v2061
  %v2067 = vmax.f32 %v2063, 0.0
  %v2068 = vmax.f32 %v2064, 0.0
  %v2069 = vmax.f32 %v2065, 0.0
  %v2070 = vmax.f32 %v2066, 0.0
  %v2071 = vlaneseq
  %v2072 = vshrl.u32 %v2071, 7
  %v2073 = vadd.s32 %v2072, 8
  %vm2074 = vcmp.eq.s32.totalorder %v2072, %v19
  %vm2075 = vcmp.eq.s32.totalorder %v2072, %v20
  %vm2076 = vcmp.eq.s32.totalorder %v2072, %v21
  %vm2077 = vcmp.eq.s32.totalorder %v2072, %v22
  %vm2078 = vcmp.eq.s32.totalorder %v2073, %v19
  %vm2079 = vcmp.eq.s32.totalorder %v2073, %v20
  %vm2080 = vcmp.eq.s32.totalorder %v2073, %v21
  %vm2081 = vcmp.eq.s32.totalorder %v2073, %v22
  %v2082 = vsel %vm2074, 1, 0
  %v2083 = vsel %vm2075, 1, 0
  %v2084 = vsel %vm2076, 1, 0
  %v2085 = vsel %vm2077, 1, 0
  %v2086 = vsel %vm2078, 1, 0
  %v2087 = vsel %vm2079, 1, 0
  %v2088 = vsel %vm2080, 1, 0
  %v2089 = vsel %vm2081, 1, 0
  %v2090 = vcvt.s32.f32 %v2082
  %v2091 = vcvt.s32.f32 %v2083
  %v2092 = vcvt.s32.f32 %v2084
  %v2093 = vcvt.s32.f32 %v2085
  %v2094 = vcvt.s32.f32 %v2086
  %v2095 = vcvt.s32.f32 %v2087
  %v2096 = vcvt.s32.f32 %v2088
  %v2097 = vcvt.s32.f32 %v2089
  %2098 = vrot.lane.b32.xlu0 %v2017, 125
  %v2099 = vpop.permute.xlu0 %2098
  %vm2100 = vcmask 130048
  %v2101 = vsel %vm2100, %v2099, 0
  %2103 = vmatprep.subr.mxu0 0.0
  %2104 = vmatpush1.msra.mxu0 0.0
  %2105 = vmatprep.subr.mxu0 0.0
  %2106 = vmatpush1.msra.mxu0 0.0
  %2107 = vmatprep.subr.mxu0 0.0
  %2108 = vmatpush1.msra.mxu0 0.0
  %2109 = vmatprep.subr.mxu0 0.0
  %2110 = vmatpush1.msra.mxu0 0.0
  %2111 = vmatprep.subr.mxu0 0.0
  %2112 = vmatpush1.msra.mxu0 0.0
  %2113 = vmatprep.subr.mxu0 0.0
  %2114 = vmatpush1.msra.mxu0 0.0
  %2115 = vmatprep.subr.mxu0 0.0
  %2116 = vmatpush1.msra.mxu0 0.0
  %2117 = vmatprep.subr.mxu0 0.0
  %2118 = vmatpush1.msra.mxu0 0.0
  %2119 = vmatprep.subr.mxu0 0.0
  %2120 = vmatpush1.msra.mxu0 0.0
  %2121 = vmatprep.subr.mxu0 0.0
  %2122 = vmatpush1.msra.mxu0 0.0
  %2123 = vmatprep.subr.mxu0 0.0
  %2124 = vmatpush1.msra.mxu0 0.0
  %2125 = vmatprep.subr.mxu0 0.0
  %2126 = vmatpush1.msra.mxu0 0.0
  %2127 = vmatprep.subr.mxu0 0.0
  %2128 = vmatpush1.msra.mxu0 0.0
  %2129 = vmatprep.subr.mxu0 0.0
  %2130 = vmatpush1.msra.mxu0 0.0
  %2131 = vmatprep.subr.mxu0 %v2095
  %2132 = vmatpush1.msra.mxu0 %v2094
  %2133 = vmatprep.subr.mxu0 %v2091
  %2134 = vmatpush1.msra.mxu0 %v2090
  %2135 = vmatprep.subr.mxu0 0.0
  %2136 = vmatpush2.msra.mxu0 0.0
  %2137 = vmatprep.subr.mxu0 0.0
  %2138 = vmatpush2.msra.mxu0 0.0
  %2139 = vmatprep.subr.mxu0 0.0
  %2140 = vmatpush2.msra.mxu0 0.0
  %2141 = vmatprep.subr.mxu0 0.0
  %2142 = vmatpush2.msra.mxu0 0.0
  %2143 = vmatprep.subr.mxu0 0.0
  %2144 = vmatpush2.msra.mxu0 0.0
  %2145 = vmatprep.subr.mxu0 0.0
  %2146 = vmatpush2.msra.mxu0 0.0
  %2147 = vmatprep.subr.mxu0 0.0
  %2148 = vmatpush2.msra.mxu0 0.0
  %2149 = vmatprep.subr.mxu0 0.0
  %2150 = vmatpush2.msra.mxu0 0.0
  %2151 = vmatprep.subr.mxu0 0.0
  %2152 = vmatpush2.msra.mxu0 0.0
  %2153 = vmatprep.subr.mxu0 0.0
  %2154 = vmatpush2.msra.mxu0 0.0
  %2155 = vmatprep.subr.mxu0 0.0
  %2156 = vmatpush2.msra.mxu0 0.0
  %2157 = vmatprep.subr.mxu0 0.0
  %2158 = vmatpush2.msra.mxu0 0.0
  %2159 = vmatprep.subr.mxu0 0.0
  %2160 = vmatpush2.msra.mxu0 0.0
  %2161 = vmatprep.subr.mxu0 0.0
  %2162 = vmatpush2.msra.mxu0 0.0
  %2163 = vmatprep.subr.mxu0 0.0
  %2164 = vmatpush2.msra.mxu0 0.0
  %2165 = vmatprep.subr.mxu0 0.0
  %2166 = vmatpush2.msra.mxu0 0.0
  %2167 = vmatprep.mubr.f32.mxu0 0.0
  %2168 = vmatmul.mubr.f32.gmra.mxu0 %v2101
  %v2169 = vpop.f32.mrf.mxu0
  %v2170 = vadd.f32 0.0, %v2169
  %v2171 = vpop.f32.mrf.mxu0
  %v2172 = vadd.f32 0.0, %v2171
  %2173 = vdwg.mxu0
  %2174 = vmatprep.subr.mxu0 0.0
  %2175 = vmatpush1.msra.mxu0 0.0
  %2176 = vmatprep.subr.mxu0 0.0
  %2177 = vmatpush1.msra.mxu0 0.0
  %2178 = vmatprep.subr.mxu0 0.0
  %2179 = vmatpush1.msra.mxu0 0.0
  %2180 = vmatprep.subr.mxu0 0.0
  %2181 = vmatpush1.msra.mxu0 0.0
  %2182 = vmatprep.subr.mxu0 0.0
  %2183 = vmatpush1.msra.mxu0 0.0
  %2184 = vmatprep.subr.mxu0 0.0
  %2185 = vmatpush1.msra.mxu0 0.0
  %2186 = vmatprep.subr.mxu0 0.0
  %2187 = vmatpush1.msra.mxu0 0.0
  %2188 = vmatprep.subr.mxu0 0.0
  %2189 = vmatpush1.msra.mxu0 0.0
  %2190 = vmatprep.subr.mxu0 0.0
  %2191 = vmatpush1.msra.mxu0 0.0
  %2192 = vmatprep.subr.mxu0 0.0
  %2193 = vmatpush1.msra.mxu0 0.0
  %2194 = vmatprep.subr.mxu0 0.0
  %2195 = vmatpush1.msra.mxu0 0.0
  %2196 = vmatprep.subr.mxu0 0.0
  %2197 = vmatpush1.msra.mxu0 0.0
  %2198 = vmatprep.subr.mxu0 0.0
  %2199 = vmatpush1.msra.mxu0 0.0
  %2200 = vmatprep.subr.mxu0 0.0
  %2201 = vmatpush1.msra.mxu0 0.0
  %2202 = vmatprep.subr.mxu0 %v2097
  %2203 = vmatpush1.msra.mxu0 %v2096
  %2204 = vmatprep.subr.mxu0 %v2093
  %2205 = vmatpush1.msra.mxu0 %v2092
  %2206 = vmatprep.subr.mxu0 0.0
  %2207 = vmatpush2.msra.mxu0 0.0
  %2208 = vmatprep.subr.mxu0 0.0
  %2209 = vmatpush2.msra.mxu0 0.0
  %2210 = vmatprep.subr.mxu0 0.0
  %2211 = vmatpush2.msra.mxu0 0.0
  %2212 = vmatprep.subr.mxu0 0.0
  %2213 = vmatpush2.msra.mxu0 0.0
  %2214 = vmatprep.subr.mxu0 0.0
  %2215 = vmatpush2.msra.mxu0 0.0
  %2216 = vmatprep.subr.mxu0 0.0
  %2217 = vmatpush2.msra.mxu0 0.0
  %2218 = vmatprep.subr.mxu0 0.0
  %2219 = vmatpush2.msra.mxu0 0.0
  %2220 = vmatprep.subr.mxu0 0.0
  %2221 = vmatpush2.msra.mxu0 0.0
  %2222 = vmatprep.subr.mxu0 0.0
  %2223 = vmatpush2.msra.mxu0 0.0
  %2224 = vmatprep.subr.mxu0 0.0
  %2225 = vmatpush2.msra.mxu0 0.0
  %2226 = vmatprep.subr.mxu0 0.0
  %2227 = vmatpush2.msra.mxu0 0.0
  %2228 = vmatprep.subr.mxu0 0.0
  %2229 = vmatpush2.msra.mxu0 0.0
  %2230 = vmatprep.subr.mxu0 0.0
  %2231 = vmatpush2.msra.mxu0 0.0
  %2232 = vmatprep.subr.mxu0 0.0
  %2233 = vmatpush2.msra.mxu0 0.0
  %2234 = vmatprep.subr.mxu0 0.0
  %2235 = vmatpush2.msra.mxu0 0.0
  %2236 = vmatprep.subr.mxu0 0.0
  %2237 = vmatpush2.msra.mxu0 0.0
  %2238 = vmatprep.mubr.f32.mxu0 0.0
  %2239 = vmatmul.mubr.f32.gmra.mxu0 %v2101
  %v2240 = vpop.f32.mrf.mxu0
  %v2241 = vadd.f32 0.0, %v2240
  %v2242 = vpop.f32.mrf.mxu0
  %v2243 = vadd.f32 0.0, %v2242
  %2244 = vdwg.mxu0
  %v2245 = vmul.f32 %v2170, %v2067
  %v2246 = vmul.f32 %v2172, %v2068
  %v2247 = vmul.f32 %v2241, %v2069
  %v2248 = vmul.f32 %v2243, %v2070
  %v2249 = vadd.f32 %v2023, %v2245
  %v2250 = vadd.f32 %v2024, %v2246
  %v2251 = vadd.f32 %v2025, %v2247
  %v2252 = vadd.f32 %v2026, %v2248
  %2253 = vst [vmem:[%s3] sm:$0xff] %v2249
  %2254 = vst [vmem:[%s3 + $0x8] sm:$0xff] %v2250
  %s2255 = scalar_lea.vmem %s3, 16
  %2256 = vst [vmem:[%s2255] sm:$0xff] %v2251
  %2257 = vst [vmem:[%s2255 + $0x8] sm:$0xff] %v2252
  // Predicated region
  $region14: #{rezero_forward.1} parent=0 // pred_check
    _
  $region15: #{rezero_forward.1} parent=0 // pred_check_branch
    %2259 = sbr.rel (0) target = $region17
  $region16: #{rezero_forward.1} parent=0 // pred_region
    _
  $region17: #{rezero_forward.1} parent=0 // pred_fallthru
    _
  // Predicated region
  $region18: #{rezero_forward.1} parent=0 // pred_check
    _
  $region19: #{rezero_forward.1} parent=0 // pred_check_branch
    %2261 = sbr.rel (0) target = $region21
  $region20: #{rezero_forward.1} parent=0 // pred_region
    _
  $region21: #{rezero_forward.1} parent=0 // pred_fallthru
    _

</llo_original>
